<compile_context>
chip_gen: v7x
topology: tpu7x:2x2x1
jax: 0.10.0
libtpu: 0.0.40
codegen_flags: <defaults>
</compile_context>

<pallas_src>
import jax
import jax.numpy as jnp
from jax import lax
from jax.experimental import pallas as pl
from jax.experimental.pallas import tpu as pltpu

_SUBLANE = 8      # f32 sublane tile
_LANE = 128       # lane tile


def _round_up(x, m):
    return (x + m - 1) // m * m


# ----------------------------- Pallas kernel -------------------------------- #

def fused_lstm_fc_kernel(x_ref, w_ih_ref, w_hh_ref, b_ref, len_ref, tfidf_ref,
                         fc_wh_ref, fc_wt_ref, fc_b_ref, o_ref,
                         xw_ref, y_ref):
    """All LSTM layers + last-valid-step select + FC head in one kernel.

    x_ref:     (T*Bp, H)   embedded input, time-major, batch padded to Bp
    w_ih_ref:  (L, H, 4H)  stacked W_ih^T (PyTorch gate order i, f, g, o)
    w_hh_ref:  (L, H, 4H)  stacked W_hh^T
    b_ref:     (L, 1, 4H)  stacked b_ih + b_hh
    len_ref:   (Bp, 1)     valid lengths (int32); 0 for padded batch rows
    tfidf_ref: (Bp, TF)    tf-idf features
    fc_wh_ref: (H, Op)     FC weight rows for the hidden part (Op lane-padded)
    fc_wt_ref: (TF, Op)    FC weight rows for the tf-idf part
    fc_b_ref:  (1, Op)     FC bias
    o_ref:     (Bp, Op)    logits (padded)
    xw_ref:    (T*Bp, 4H)  VMEM scratch: hoisted input projection
    y_ref:     (T*Bp, H)   VMEM scratch: inter-layer activations (on-chip)
    """
    TB, H = x_ref.shape
    Bp = len_ref.shape[0]
    T = TB // Bp
    L = w_ih_ref.shape[0]

    len_col = len_ref[...]                         # (Bp, 1) int32, hoisted
    last = jnp.zeros((Bp, H), jnp.float32)

    for layer in range(L):                         # static Python loop over layers
        is_last = layer + 1 == L
        src_ref = x_ref if layer == 0 else y_ref

        # Hoisted input projection (+ bias) for the whole sequence:
        # one large MXU matmul off the serial critical path.
        xw_ref[...] = (
            jnp.dot(src_ref[...], w_ih_ref[layer],
                    preferred_element_type=jnp.float32) + b_ref[layer])

        w_hh = w_hh_ref[layer]                     # (H, 4H), resident across steps

        def step(t, carry):
            h, c, last = carry
            row = pl.multiple_of(t * Bp, _SUBLANE)
            # Only the recurrent term is inside the loop: one MXU push / step.
            gates = xw_ref[pl.ds(row, Bp), :] + jnp.dot(
                h, w_hh, preferred_element_type=jnp.float32)        # (Bp, 4H)
            sg = jax.nn.sigmoid(gates)             # full-width EUP pass
            tg = jnp.tanh(gates)                   # full-width EUP pass
            i_g = sg[:, 0 * H:1 * H]
            f_g = sg[:, 1 * H:2 * H]
            g_g = tg[:, 2 * H:3 * H]
            o_g = sg[:, 3 * H:4 * H]
            c = f_g * c + i_g * g_g
            h = o_g * jnp.tanh(c)
            if is_last:
                # Select the last valid step on the fly: no (T,B,H) writeback,
                # no gather in the wrapper.  (length 0 -> stays zero.)
                last = jnp.where(len_col == t + 1, h, last)
            else:
                y_ref[pl.ds(row, Bp), :] = h       # stays in VMEM for next layer
            return h, c, last

        zeros = jnp.zeros((Bp, H), jnp.float32)
        _, _, last = lax.fori_loop(0, T, step, (zeros, zeros, last),
                                   unroll=True)

    # Fused FC head: hidden path + tfidf path (avoids a lane concat); output
    # is lane-padded so the final store is an unmasked, lane-dense vst.
    o_ref[...] = (
        jnp.dot(last, fc_wh_ref[...], preferred_element_type=jnp.float32)
        + jnp.dot(tfidf_ref[...], fc_wt_ref[...],
                  preferred_element_type=jnp.float32)
        + fc_b_ref[...])


# ------------------------------ JAX wrapper ---------------------------------- #

@jax.jit
def sentiment_lstm_forward(params, input_ids, attention_mask, tfidf_vector):
    B, T = input_ids.shape
    H = params["embedding"].shape[1]
    TF = tfidf_vector.shape[1]
    OUT = params["fc_b"].shape[-1]

    Bp = _round_up(max(B, _SUBLANE), _SUBLANE)     # pad batch to sublane multiple
    Op = _round_up(OUT, _LANE)                     # pad FC output to lane multiple

    # --- XLA glue: embedding gather, time-major layout, padding --------------
    emb = params["embedding"][input_ids].astype(jnp.float32)        # (B, T, H)
    x = jnp.transpose(emb, (1, 0, 2))                               # (T, B, H)
    x = jnp.pad(x, ((0, 0), (0, Bp - B), (0, 0))).reshape(T * Bp, H)

    lengths = attention_mask.sum(axis=1).astype(jnp.int32)          # (B,)
    lengths = jnp.pad(lengths, (0, Bp - B)).reshape(Bp, 1)

    tfidf = jnp.pad(tfidf_vector.astype(jnp.float32), ((0, Bp - B), (0, 0)))

    w_ih = jnp.stack([lyr["w_ih_t"] for lyr in params["lstm"]])     # (L, H, 4H)
    w_hh = jnp.stack([lyr["w_hh_t"] for lyr in params["lstm"]])     # (L, H, 4H)
    b = jnp.stack([lyr["b"] for lyr in params["lstm"]])             # (L, 1, 4H)

    fc_w = params["fc_w_t"]                                         # (H+TF, OUT)
    fc_wh = jnp.pad(fc_w[:H], ((0, 0), (0, Op - OUT)))              # (H, Op)
    fc_wt = jnp.pad(fc_w[H:], ((0, 0), (0, Op - OUT)))              # (TF, Op)
    fc_b = jnp.pad(params["fc_b"], ((0, 0), (0, Op - OUT)))         # (1, Op)

    out = pl.pallas_call(
        fused_lstm_fc_kernel,
        out_shape=jax.ShapeDtypeStruct((Bp, Op), jnp.float32),
        in_specs=[pl.BlockSpec(memory_space=pltpu.MemorySpace.VMEM)] * 9,
        out_specs=pl.BlockSpec(memory_space=pltpu.MemorySpace.VMEM),
        scratch_shapes=[
            pltpu.VMEM((T * Bp, 4 * H), jnp.float32),   # hoisted input proj
            pltpu.VMEM((T * Bp, H), jnp.float32),       # inter-layer activations
        ],
    )(x, w_ih, w_hh, b, lengths, tfidf, fc_wh, fc_wt, fc_b)

    # TODO(synk): at production T/B/H add a T-chunk grid (carried h/c scratch,
    # pl.Buffered) and bf16 matmul operands; whole-array VMEM is fine at these
    # test shapes but would exceed v7x's 64 MiB VMEM for long sequences.
    return out[:B, :OUT]


# --------------------------- pure-JAX reference ------------------------------ #

def reference_forward(params, input_ids, attention_mask, tfidf_vector):
    emb = params["embedding"][input_ids].astype(jnp.float32)        # (B, T, H)
    B, T, H = emb.shape
    h_seq = emb
    for layer in params["lstm"]:
        wih_t, whh_t, b = layer["w_ih_t"], layer["w_hh_t"], layer["b"]

        def step(carry, x_t):
            h, c = carry
            gates = x_t @ wih_t + h @ whh_t + b
            i, f, g, o = jnp.split(gates, 4, axis=1)
            c = jax.nn.sigmoid(f) * c + jax.nn.sigmoid(i) * jnp.tanh(g)
            h = jax.nn.sigmoid(o) * jnp.tanh(c)
            return (h, c), h

        init = (jnp.zeros((B, H), jnp.float32), jnp.zeros((B, H), jnp.float32))
        _, ys = lax.scan(step, init, jnp.swapaxes(h_seq, 0, 1))
        h_seq = jnp.swapaxes(ys, 0, 1)
    lengths = attention_mask.sum(axis=1).astype(jnp.int32)
    last = h_seq[jnp.arange(B), lengths - 1, :]
    combined = jnp.concatenate([last, tfidf_vector], axis=1)
    return combined @ params["fc_w_t"] + params["fc_b"]


# ----------------------------------- main ------------------------------------ #

if __name__ == "__main__":
    # Small, module-consistent shapes.
    VOCAB = 50          # input_dim
    HIDDEN = 32         # hidden_dim
    OUTPUT = 2          # output_dim
    N_LAYERS = 2
    TFIDF = 100         # fc expects hidden_dim + 100
    B, T = 2, 8

    key = jax.random.PRNGKey(0)
    keys = jax.random.split(key, 4 + 4 * N_LAYERS)

    # Deterministic synthetic parameters (PyTorch shapes, pre-transposed for MXU).
    params = {
        "embedding": jax.random.normal(keys[0], (VOCAB, HIDDEN), jnp.float32) * 0.1,
        "lstm": [],
        # nn.Linear: weight (OUTPUT, HIDDEN+100), bias (OUTPUT,)
        "fc_w_t": (jax.random.normal(keys[1], (OUTPUT, HIDDEN + TFIDF),
                                     jnp.float32) * 0.05).T,
        "fc_b": jax.random.normal(keys[2], (1, OUTPUT), jnp.float32) * 0.05,
    }
    for l in range(N_LAYERS):
        k0, k1, k2, k3 = keys[4 + 4 * l: 8 + 4 * l]
        w_ih = jax.random.normal(k0, (4 * HIDDEN, HIDDEN), jnp.float32) * 0.1
        w_hh = jax.random.normal(k1, (4 * HIDDEN, HIDDEN), jnp.float32) * 0.1
        b_ih = jax.random.normal(k2, (4 * HIDDEN,), jnp.float32) * 0.1
        b_hh = jax.random.normal(k3, (4 * HIDDEN,), jnp.float32) * 0.1
        params["lstm"].append({
            "w_ih_t": w_ih.T,                                  # (H, 4H)
            "w_hh_t": w_hh.T,                                  # (H, 4H)
            "b": (b_ih + b_hh).reshape(1, 4 * HIDDEN),         # (1, 4H)
        })

    # Deterministic inputs.
    input_ids = jax.random.randint(keys[3], (B, T), 0, VOCAB, jnp.int32)
    lengths = jnp.array([T, 5], jnp.int32)                     # ragged lengths
    attention_mask = (jnp.arange(T)[None, :] < lengths[:, None]).astype(jnp.int32)
    tfidf_vector = jax.random.normal(jax.random.PRNGKey(7), (B, TFIDF), jnp.float32)

    out = sentiment_lstm_forward(params, input_ids, attention_mask, tfidf_vector)
    out = jax.block_until_ready(out)

    ref = reference_forward(params, input_ids, attention_mask, tfidf_vector)
    assert out.shape == (B, OUTPUT)
    assert jnp.allclose(out, ref, atol=1e-4, rtol=1e-4), (out, ref)

    print("KERNEL_OK")
</pallas_src>

<mosaic_0001>
module attributes {stable_mosaic.version = 11 : i64} {
  func.func @fused_lstm_fc_kernel(%arg0: memref<64x32xf32, #tpu.memory_space<vmem>>, %arg1: memref<2x32x128xf32, #tpu.memory_space<vmem>>, %arg2: memref<2x32x128xf32, #tpu.memory_space<vmem>>, %arg3: memref<2x1x128xf32, #tpu.memory_space<vmem>>, %arg4: memref<8x1xi32, #tpu.memory_space<vmem>>, %arg5: memref<8x100xf32, #tpu.memory_space<vmem>>, %arg6: memref<32x128xf32, #tpu.memory_space<vmem>>, %arg7: memref<100x128xf32, #tpu.memory_space<vmem>>, %arg8: memref<1x128xf32, #tpu.memory_space<vmem>>, %arg9: memref<8x128xf32, #tpu.memory_space<vmem>>, %arg10: memref<64x128xf32, #tpu.memory_space<vmem>>, %arg11: memref<64x32xf32, #tpu.memory_space<vmem>>) attributes {dimension_semantics = [], scalar_prefetch = 0 : i64, scratch_operands = 2 : i64, tpu.core_type = #tpu.core_type<tc>} {
    %c0 = arith.constant 0 : index
    %c0_0 = arith.constant 0 : index
    %0 = vector.load %arg4[%c0, %c0_0] : memref<8x1xi32, #tpu.memory_space<vmem>>, vector<8x1xi32>
    %cst = arith.constant 0.000000e+00 : f32
    %1 = vector.broadcast %cst : f32 to vector<8x32xf32>
    %c0_1 = arith.constant 0 : index
    %c0_2 = arith.constant 0 : index
    %2 = vector.load %arg0[%c0_1, %c0_2] : memref<64x32xf32, #tpu.memory_space<vmem>>, vector<64x32xf32>
    %c0_3 = arith.constant 0 : index
    %c0_4 = arith.constant 0 : index
    %c0_5 = arith.constant 0 : index
    %3 = vector.load %arg1[%c0_3, %c0_4, %c0_5] : memref<2x32x128xf32, #tpu.memory_space<vmem>>, vector<1x32x128xf32>
    %4 = vector.shape_cast %3 : vector<1x32x128xf32> to vector<32x128xf32>
    %cst_6 = arith.constant dense<0.000000e+00> : vector<64x128xf32>
    %5 = tpu.matmul %2, %4, %cst_6 {dimension_numbers = #tpu.dot_dimension_numbers<[1], [0], [0], [1], [0, 0, 1, 1], [], []>} : vector<64x32xf32>, vector<32x128xf32>, vector<64x128xf32> -> vector<64x128xf32>
    %c0_7 = arith.constant 0 : index
    %c0_8 = arith.constant 0 : index
    %c0_9 = arith.constant 0 : index
    %6 = vector.load %arg3[%c0_7, %c0_8, %c0_9] : memref<2x1x128xf32, #tpu.memory_space<vmem>>, vector<1x1x128xf32>
    %7 = vector.shape_cast %6 : vector<1x1x128xf32> to vector<1x128xf32>
    %8 = vector.broadcast %7 : vector<1x128xf32> to vector<64x128xf32>
    %9 = arith.addf %5, %8 : vector<64x128xf32>
    %c0_10 = arith.constant 0 : index
    %c0_11 = arith.constant 0 : index
    %10 = vector.load %arg10[%c0_10, %c0_11] : memref<64x128xf32, #tpu.memory_space<vmem>>, vector<64x128xf32>
    tpu.vector_store %arg10[%c0_10, %c0_11], %9 {strides = array<i32>} : memref<64x128xf32, #tpu.memory_space<vmem>>, vector<64x128xf32>,
    %c0_12 = arith.constant 0 : index
    %c0_13 = arith.constant 0 : index
    %c0_14 = arith.constant 0 : index
    %11 = vector.load %arg2[%c0_12, %c0_13, %c0_14] : memref<2x32x128xf32, #tpu.memory_space<vmem>>, vector<1x32x128xf32>
    %12 = vector.shape_cast %11 : vector<1x32x128xf32> to vector<32x128xf32>
    %cst_15 = arith.constant 0.000000e+00 : f32
    %13 = vector.broadcast %cst_15 : f32 to vector<8x32xf32>
    %c0_i32 = arith.constant 0 : i32
    %c8_i32 = arith.constant 8 : i32
    %14 = arith.muli %c0_i32, %c8_i32 : i32
    %15 = tpu.assume_multiple %14, 8 : i32
    %16 = arith.index_cast %15 : i32 to index
    %c0_16 = arith.constant 0 : index
    %17 = vector.load %arg10[%16, %c0_16] : memref<64x128xf32, #tpu.memory_space<vmem>>, vector<8x128xf32>
    %cst_17 = arith.constant dense<0.000000e+00> : vector<8x128xf32>
    %18 = tpu.matmul %13, %12, %cst_17 {dimension_numbers = #tpu.dot_dimension_numbers<[1], [0], [0], [1], [0, 0, 1, 1], [], []>} : vector<8x32xf32>, vector<32x128xf32>, vector<8x128xf32> -> vector<8x128xf32>
    %19 = arith.addf %17, %18 : vector<8x128xf32>
    %20 = arith.negf %19 : vector<8x128xf32>
    %21 = math.exp %20 : vector<8x128xf32>
    %cst_18 = arith.constant 1.000000e+00 : f32
    %22 = vector.broadcast %cst_18 : f32 to vector<8x128xf32>
    %23 = arith.addf %22, %21 : vector<8x128xf32>
    %24 = arith.divf %22, %23 : vector<8x128xf32>
    %25 = math.tanh %19 : vector<8x128xf32>
    %26 = vector.extract_strided_slice %24 {offsets = [0, 0], sizes = [8, 32], strides = [1, 1]} : vector<8x128xf32> to vector<8x32xf32>
    %27 = vector.extract_strided_slice %24 {offsets = [0, 32], sizes = [8, 32], strides = [1, 1]} : vector<8x128xf32> to vector<8x32xf32>
    %28 = vector.extract_strided_slice %25 {offsets = [0, 64], sizes = [8, 32], strides = [1, 1]} : vector<8x128xf32> to vector<8x32xf32>
    %29 = vector.extract_strided_slice %24 {offsets = [0, 96], sizes = [8, 32], strides = [1, 1]} : vector<8x128xf32> to vector<8x32xf32>
    %30 = arith.mulf %27, %13 : vector<8x32xf32>
    %31 = arith.mulf %26, %28 : vector<8x32xf32>
    %32 = arith.addf %30, %31 : vector<8x32xf32>
    %33 = math.tanh %32 : vector<8x32xf32>
    %34 = arith.mulf %29, %33 : vector<8x32xf32>
    %35 = arith.index_cast %15 : i32 to index
    %c0_19 = arith.constant 0 : index
    %36 = vector.load %arg11[%35, %c0_19] : memref<64x32xf32, #tpu.memory_space<vmem>>, vector<8x32xf32>
    tpu.vector_store %arg11[%35, %c0_19], %34 {strides = array<i32>} : memref<64x32xf32, #tpu.memory_space<vmem>>, vector<8x32xf32>,
    %c1_i32 = arith.constant 1 : i32
    %c8_i32_20 = arith.constant 8 : i32
    %37 = arith.muli %c1_i32, %c8_i32_20 : i32
    %38 = tpu.assume_multiple %37, 8 : i32
    %39 = arith.index_cast %38 : i32 to index
    %c0_21 = arith.constant 0 : index
    %40 = vector.load %arg10[%39, %c0_21] : memref<64x128xf32, #tpu.memory_space<vmem>>, vector<8x128xf32>
    %cst_22 = arith.constant dense<0.000000e+00> : vector<8x128xf32>
    %41 = tpu.matmul %34, %12, %cst_22 {dimension_numbers = #tpu.dot_dimension_numbers<[1], [0], [0], [1], [0, 0, 1, 1], [], []>} : vector<8x32xf32>, vector<32x128xf32>, vector<8x128xf32> -> vector<8x128xf32>
    %42 = arith.addf %40, %41 : vector<8x128xf32>
    %43 = arith.negf %42 : vector<8x128xf32>
    %44 = math.exp %43 : vector<8x128xf32>
    %cst_23 = arith.constant 1.000000e+00 : f32
    %45 = vector.broadcast %cst_23 : f32 to vector<8x128xf32>
    %46 = arith.addf %45, %44 : vector<8x128xf32>
    %47 = arith.divf %45, %46 : vector<8x128xf32>
    %48 = math.tanh %42 : vector<8x128xf32>
    %49 = vector.extract_strided_slice %47 {offsets = [0, 0], sizes = [8, 32], strides = [1, 1]} : vector<8x128xf32> to vector<8x32xf32>
    %50 = vector.extract_strided_slice %47 {offsets = [0, 32], sizes = [8, 32], strides = [1, 1]} : vector<8x128xf32> to vector<8x32xf32>
    %51 = vector.extract_strided_slice %48 {offsets = [0, 64], sizes = [8, 32], strides = [1, 1]} : vector<8x128xf32> to vector<8x32xf32>
    %52 = vector.extract_strided_slice %47 {offsets = [0, 96], sizes = [8, 32], strides = [1, 1]} : vector<8x128xf32> to vector<8x32xf32>
    %53 = arith.mulf %50, %32 : vector<8x32xf32>
    %54 = arith.mulf %49, %51 : vector<8x32xf32>
    %55 = arith.addf %53, %54 : vector<8x32xf32>
    %56 = math.tanh %55 : vector<8x32xf32>
    %57 = arith.mulf %52, %56 : vector<8x32xf32>
    %58 = arith.index_cast %38 : i32 to index
    %c0_24 = arith.constant 0 : index
    %59 = vector.load %arg11[%58, %c0_24] : memref<64x32xf32, #tpu.memory_space<vmem>>, vector<8x32xf32>
    tpu.vector_store %arg11[%58, %c0_24], %57 {strides = array<i32>} : memref<64x32xf32, #tpu.memory_space<vmem>>, vector<8x32xf32>,
    %c2_i32 = arith.constant 2 : i32
    %c8_i32_25 = arith.constant 8 : i32
    %60 = arith.muli %c2_i32, %c8_i32_25 : i32
    %61 = tpu.assume_multiple %60, 8 : i32
    %62 = arith.index_cast %61 : i32 to index
    %c0_26 = arith.constant 0 : index
    %63 = vector.load %arg10[%62, %c0_26] : memref<64x128xf32, #tpu.memory_space<vmem>>, vector<8x128xf32>
    %cst_27 = arith.constant dense<0.000000e+00> : vector<8x128xf32>
    %64 = tpu.matmul %57, %12, %cst_27 {dimension_numbers = #tpu.dot_dimension_numbers<[1], [0], [0], [1], [0, 0, 1, 1], [], []>} : vector<8x32xf32>, vector<32x128xf32>, vector<8x128xf32> -> vector<8x128xf32>
    %65 = arith.addf %63, %64 : vector<8x128xf32>
    %66 = arith.negf %65 : vector<8x128xf32>
    %67 = math.exp %66 : vector<8x128xf32>
    %cst_28 = arith.constant 1.000000e+00 : f32
    %68 = vector.broadcast %cst_28 : f32 to vector<8x128xf32>
    %69 = arith.addf %68, %67 : vector<8x128xf32>
    %70 = arith.divf %68, %69 : vector<8x128xf32>
    %71 = math.tanh %65 : vector<8x128xf32>
    %72 = vector.extract_strided_slice %70 {offsets = [0, 0], sizes = [8, 32], strides = [1, 1]} : vector<8x128xf32> to vector<8x32xf32>
    %73 = vector.extract_strided_slice %70 {offsets = [0, 32], sizes = [8, 32], strides = [1, 1]} : vector<8x128xf32> to vector<8x32xf32>
    %74 = vector.extract_strided_slice %71 {offsets = [0, 64], sizes = [8, 32], strides = [1, 1]} : vector<8x128xf32> to vector<8x32xf32>
    %75 = vector.extract_strided_slice %70 {offsets = [0, 96], sizes = [8, 32], strides = [1, 1]} : vector<8x128xf32> to vector<8x32xf32>
    %76 = arith.mulf %73, %55 : vector<8x32xf32>
    %77 = arith.mulf %72, %74 : vector<8x32xf32>
    %78 = arith.addf %76, %77 : vector<8x32xf32>
    %79 = math.tanh %78 : vector<8x32xf32>
    %80 = arith.mulf %75, %79 : vector<8x32xf32>
    %81 = arith.index_cast %61 : i32 to index
    %c0_29 = arith.constant 0 : index
    %82 = vector.load %arg11[%81, %c0_29] : memref<64x32xf32, #tpu.memory_space<vmem>>, vector<8x32xf32>
    tpu.vector_store %arg11[%81, %c0_29], %80 {strides = array<i32>} : memref<64x32xf32, #tpu.memory_space<vmem>>, vector<8x32xf32>,
    %c3_i32 = arith.constant 3 : i32
    %c8_i32_30 = arith.constant 8 : i32
    %83 = arith.muli %c3_i32, %c8_i32_30 : i32
    %84 = tpu.assume_multiple %83, 8 : i32
    %85 = arith.index_cast %84 : i32 to index
    %c0_31 = arith.constant 0 : index
    %86 = vector.load %arg10[%85, %c0_31] : memref<64x128xf32, #tpu.memory_space<vmem>>, vector<8x128xf32>
    %cst_32 = arith.constant dense<0.000000e+00> : vector<8x128xf32>
    %87 = tpu.matmul %80, %12, %cst_32 {dimension_numbers = #tpu.dot_dimension_numbers<[1], [0], [0], [1], [0, 0, 1, 1], [], []>} : vector<8x32xf32>, vector<32x128xf32>, vector<8x128xf32> -> vector<8x128xf32>
    %88 = arith.addf %86, %87 : vector<8x128xf32>
    %89 = arith.negf %88 : vector<8x128xf32>
    %90 = math.exp %89 : vector<8x128xf32>
    %cst_33 = arith.constant 1.000000e+00 : f32
    %91 = vector.broadcast %cst_33 : f32 to vector<8x128xf32>
    %92 = arith.addf %91, %90 : vector<8x128xf32>
    %93 = arith.divf %91, %92 : vector<8x128xf32>
    %94 = math.tanh %88 : vector<8x128xf32>
    %95 = vector.extract_strided_slice %93 {offsets = [0, 0], sizes = [8, 32], strides = [1, 1]} : vector<8x128xf32> to vector<8x32xf32>
    %96 = vector.extract_strided_slice %93 {offsets = [0, 32], sizes = [8, 32], strides = [1, 1]} : vector<8x128xf32> to vector<8x32xf32>
    %97 = vector.extract_strided_slice %94 {offsets = [0, 64], sizes = [8, 32], strides = [1, 1]} : vector<8x128xf32> to vector<8x32xf32>
    %98 = vector.extract_strided_slice %93 {offsets = [0, 96], sizes = [8, 32], strides = [1, 1]} : vector<8x128xf32> to vector<8x32xf32>
    %99 = arith.mulf %96, %78 : vector<8x32xf32>
    %100 = arith.mulf %95, %97 : vector<8x32xf32>
    %101 = arith.addf %99, %100 : vector<8x32xf32>
    %102 = math.tanh %101 : vector<8x32xf32>
    %103 = arith.mulf %98, %102 : vector<8x32xf32>
    %104 = arith.index_cast %84 : i32 to index
    %c0_34 = arith.constant 0 : index
    %105 = vector.load %arg11[%104, %c0_34] : memref<64x32xf32, #tpu.memory_space<vmem>>, vector<8x32xf32>
    tpu.vector_store %arg11[%104, %c0_34], %103 {strides = array<i32>} : memref<64x32xf32, #tpu.memory_space<vmem>>, vector<8x32xf32>,
    %c4_i32 = arith.constant 4 : i32
    %c8_i32_35 = arith.constant 8 : i32
    %106 = arith.muli %c4_i32, %c8_i32_35 : i32
    %107 = tpu.assume_multiple %106, 8 : i32
    %108 = arith.index_cast %107 : i32 to index
    %c0_36 = arith.constant 0 : index
    %109 = vector.load %arg10[%108, %c0_36] : memref<64x128xf32, #tpu.memory_space<vmem>>, vector<8x128xf32>
    %cst_37 = arith.constant dense<0.000000e+00> : vector<8x128xf32>
    %110 = tpu.matmul %103, %12, %cst_37 {dimension_numbers = #tpu.dot_dimension_numbers<[1], [0], [0], [1], [0, 0, 1, 1], [], []>} : vector<8x32xf32>, vector<32x128xf32>, vector<8x128xf32> -> vector<8x128xf32>
    %111 = arith.addf %109, %110 : vector<8x128xf32>
    %112 = arith.negf %111 : vector<8x128xf32>
    %113 = math.exp %112 : vector<8x128xf32>
    %cst_38 = arith.constant 1.000000e+00 : f32
    %114 = vector.broadcast %cst_38 : f32 to vector<8x128xf32>
    %115 = arith.addf %114, %113 : vector<8x128xf32>
    %116 = arith.divf %114, %115 : vector<8x128xf32>
    %117 = math.tanh %111 : vector<8x128xf32>
    %118 = vector.extract_strided_slice %116 {offsets = [0, 0], sizes = [8, 32], strides = [1, 1]} : vector<8x128xf32> to vector<8x32xf32>
    %119 = vector.extract_strided_slice %116 {offsets = [0, 32], sizes = [8, 32], strides = [1, 1]} : vector<8x128xf32> to vector<8x32xf32>
    %120 = vector.extract_strided_slice %117 {offsets = [0, 64], sizes = [8, 32], strides = [1, 1]} : vector<8x128xf32> to vector<8x32xf32>
    %121 = vector.extract_strided_slice %116 {offsets = [0, 96], sizes = [8, 32], strides = [1, 1]} : vector<8x128xf32> to vector<8x32xf32>
    %122 = arith.mulf %119, %101 : vector<8x32xf32>
    %123 = arith.mulf %118, %120 : vector<8x32xf32>
    %124 = arith.addf %122, %123 : vector<8x32xf32>
    %125 = math.tanh %124 : vector<8x32xf32>
    %126 = arith.mulf %121, %125 : vector<8x32xf32>
    %127 = arith.index_cast %107 : i32 to index
    %c0_39 = arith.constant 0 : index
    %128 = vector.load %arg11[%127, %c0_39] : memref<64x32xf32, #tpu.memory_space<vmem>>, vector<8x32xf32>
    tpu.vector_store %arg11[%127, %c0_39], %126 {strides = array<i32>} : memref<64x32xf32, #tpu.memory_space<vmem>>, vector<8x32xf32>,
    %c5_i32 = arith.constant 5 : i32
    %c8_i32_40 = arith.constant 8 : i32
    %129 = arith.muli %c5_i32, %c8_i32_40 : i32
    %130 = tpu.assume_multiple %129, 8 : i32
    %131 = arith.index_cast %130 : i32 to index
    %c0_41 = arith.constant 0 : index
    %132 = vector.load %arg10[%131, %c0_41] : memref<64x128xf32, #tpu.memory_space<vmem>>, vector<8x128xf32>
    %cst_42 = arith.constant dense<0.000000e+00> : vector<8x128xf32>
    %133 = tpu.matmul %126, %12, %cst_42 {dimension_numbers = #tpu.dot_dimension_numbers<[1], [0], [0], [1], [0, 0, 1, 1], [], []>} : vector<8x32xf32>, vector<32x128xf32>, vector<8x128xf32> -> vector<8x128xf32>
    %134 = arith.addf %132, %133 : vector<8x128xf32>
    %135 = arith.negf %134 : vector<8x128xf32>
    %136 = math.exp %135 : vector<8x128xf32>
    %cst_43 = arith.constant 1.000000e+00 : f32
    %137 = vector.broadcast %cst_43 : f32 to vector<8x128xf32>
    %138 = arith.addf %137, %136 : vector<8x128xf32>
    %139 = arith.divf %137, %138 : vector<8x128xf32>
    %140 = math.tanh %134 : vector<8x128xf32>
    %141 = vector.extract_strided_slice %139 {offsets = [0, 0], sizes = [8, 32], strides = [1, 1]} : vector<8x128xf32> to vector<8x32xf32>
    %142 = vector.extract_strided_slice %139 {offsets = [0, 32], sizes = [8, 32], strides = [1, 1]} : vector<8x128xf32> to vector<8x32xf32>
    %143 = vector.extract_strided_slice %140 {offsets = [0, 64], sizes = [8, 32], strides = [1, 1]} : vector<8x128xf32> to vector<8x32xf32>
    %144 = vector.extract_strided_slice %139 {offsets = [0, 96], sizes = [8, 32], strides = [1, 1]} : vector<8x128xf32> to vector<8x32xf32>
    %145 = arith.mulf %142, %124 : vector<8x32xf32>
    %146 = arith.mulf %141, %143 : vector<8x32xf32>
    %147 = arith.addf %145, %146 : vector<8x32xf32>
    %148 = math.tanh %147 : vector<8x32xf32>
    %149 = arith.mulf %144, %148 : vector<8x32xf32>
    %150 = arith.index_cast %130 : i32 to index
    %c0_44 = arith.constant 0 : index
    %151 = vector.load %arg11[%150, %c0_44] : memref<64x32xf32, #tpu.memory_space<vmem>>, vector<8x32xf32>
    tpu.vector_store %arg11[%150, %c0_44], %149 {strides = array<i32>} : memref<64x32xf32, #tpu.memory_space<vmem>>, vector<8x32xf32>,
    %c6_i32 = arith.constant 6 : i32
    %c8_i32_45 = arith.constant 8 : i32
    %152 = arith.muli %c6_i32, %c8_i32_45 : i32
    %153 = tpu.assume_multiple %152, 8 : i32
    %154 = arith.index_cast %153 : i32 to index
    %c0_46 = arith.constant 0 : index
    %155 = vector.load %arg10[%154, %c0_46] : memref<64x128xf32, #tpu.memory_space<vmem>>, vector<8x128xf32>
    %cst_47 = arith.constant dense<0.000000e+00> : vector<8x128xf32>
    %156 = tpu.matmul %149, %12, %cst_47 {dimension_numbers = #tpu.dot_dimension_numbers<[1], [0], [0], [1], [0, 0, 1, 1], [], []>} : vector<8x32xf32>, vector<32x128xf32>, vector<8x128xf32> -> vector<8x128xf32>
    %157 = arith.addf %155, %156 : vector<8x128xf32>
    %158 = arith.negf %157 : vector<8x128xf32>
    %159 = math.exp %158 : vector<8x128xf32>
    %cst_48 = arith.constant 1.000000e+00 : f32
    %160 = vector.broadcast %cst_48 : f32 to vector<8x128xf32>
    %161 = arith.addf %160, %159 : vector<8x128xf32>
    %162 = arith.divf %160, %161 : vector<8x128xf32>
    %163 = math.tanh %157 : vector<8x128xf32>
    %164 = vector.extract_strided_slice %162 {offsets = [0, 0], sizes = [8, 32], strides = [1, 1]} : vector<8x128xf32> to vector<8x32xf32>
    %165 = vector.extract_strided_slice %162 {offsets = [0, 32], sizes = [8, 32], strides = [1, 1]} : vector<8x128xf32> to vector<8x32xf32>
    %166 = vector.extract_strided_slice %163 {offsets = [0, 64], sizes = [8, 32], strides = [1, 1]} : vector<8x128xf32> to vector<8x32xf32>
    %167 = vector.extract_strided_slice %162 {offsets = [0, 96], sizes = [8, 32], strides = [1, 1]} : vector<8x128xf32> to vector<8x32xf32>
    %168 = arith.mulf %165, %147 : vector<8x32xf32>
    %169 = arith.mulf %164, %166 : vector<8x32xf32>
    %170 = arith.addf %168, %169 : vector<8x32xf32>
    %171 = math.tanh %170 : vector<8x32xf32>
    %172 = arith.mulf %167, %171 : vector<8x32xf32>
    %173 = arith.index_cast %153 : i32 to index
    %c0_49 = arith.constant 0 : index
    %174 = vector.load %arg11[%173, %c0_49] : memref<64x32xf32, #tpu.memory_space<vmem>>, vector<8x32xf32>
    tpu.vector_store %arg11[%173, %c0_49], %172 {strides = array<i32>} : memref<64x32xf32, #tpu.memory_space<vmem>>, vector<8x32xf32>,
    %c7_i32 = arith.constant 7 : i32
    %c8_i32_50 = arith.constant 8 : i32
    %175 = arith.muli %c7_i32, %c8_i32_50 : i32
    %176 = tpu.assume_multiple %175, 8 : i32
    %177 = arith.index_cast %176 : i32 to index
    %c0_51 = arith.constant 0 : index
    %178 = vector.load %arg10[%177, %c0_51] : memref<64x128xf32, #tpu.memory_space<vmem>>, vector<8x128xf32>
    %cst_52 = arith.constant dense<0.000000e+00> : vector<8x128xf32>
    %179 = tpu.matmul %172, %12, %cst_52 {dimension_numbers = #tpu.dot_dimension_numbers<[1], [0], [0], [1], [0, 0, 1, 1], [], []>} : vector<8x32xf32>, vector<32x128xf32>, vector<8x128xf32> -> vector<8x128xf32>
    %180 = arith.addf %178, %179 : vector<8x128xf32>
    %181 = arith.negf %180 : vector<8x128xf32>
    %182 = math.exp %181 : vector<8x128xf32>
    %cst_53 = arith.constant 1.000000e+00 : f32
    %183 = vector.broadcast %cst_53 : f32 to vector<8x128xf32>
    %184 = arith.addf %183, %182 : vector<8x128xf32>
    %185 = arith.divf %183, %184 : vector<8x128xf32>
    %186 = math.tanh %180 : vector<8x128xf32>
    %187 = vector.extract_strided_slice %185 {offsets = [0, 0], sizes = [8, 32], strides = [1, 1]} : vector<8x128xf32> to vector<8x32xf32>
    %188 = vector.extract_strided_slice %185 {offsets = [0, 32], sizes = [8, 32], strides = [1, 1]} : vector<8x128xf32> to vector<8x32xf32>
    %189 = vector.extract_strided_slice %186 {offsets = [0, 64], sizes = [8, 32], strides = [1, 1]} : vector<8x128xf32> to vector<8x32xf32>
    %190 = vector.extract_strided_slice %185 {offsets = [0, 96], sizes = [8, 32], strides = [1, 1]} : vector<8x128xf32> to vector<8x32xf32>
    %191 = arith.mulf %188, %170 : vector<8x32xf32>
    %192 = arith.mulf %187, %189 : vector<8x32xf32>
    %193 = arith.addf %191, %192 : vector<8x32xf32>
    %194 = math.tanh %193 : vector<8x32xf32>
    %195 = arith.mulf %190, %194 : vector<8x32xf32>
    %196 = arith.index_cast %176 : i32 to index
    %c0_54 = arith.constant 0 : index
    %197 = vector.load %arg11[%196, %c0_54] : memref<64x32xf32, #tpu.memory_space<vmem>>, vector<8x32xf32>
    tpu.vector_store %arg11[%196, %c0_54], %195 {strides = array<i32>} : memref<64x32xf32, #tpu.memory_space<vmem>>, vector<8x32xf32>,
    %c8_i32_55 = arith.constant 8 : i32
    %c0_56 = arith.constant 0 : index
    %c0_57 = arith.constant 0 : index
    %198 = vector.load %arg11[%c0_56, %c0_57] : memref<64x32xf32, #tpu.memory_space<vmem>>, vector<64x32xf32>
    %c1 = arith.constant 1 : index
    %c0_58 = arith.constant 0 : index
    %c0_59 = arith.constant 0 : index
    %199 = vector.load %arg1[%c1, %c0_58, %c0_59] : memref<2x32x128xf32, #tpu.memory_space<vmem>>, vector<1x32x128xf32>
    %200 = vector.shape_cast %199 : vector<1x32x128xf32> to vector<32x128xf32>
    %cst_60 = arith.constant dense<0.000000e+00> : vector<64x128xf32>
    %201 = tpu.matmul %198, %200, %cst_60 {dimension_numbers = #tpu.dot_dimension_numbers<[1], [0], [0], [1], [0, 0, 1, 1], [], []>} : vector<64x32xf32>, vector<32x128xf32>, vector<64x128xf32> -> vector<64x128xf32>
    %c1_61 = arith.constant 1 : index
    %c0_62 = arith.constant 0 : index
    %c0_63 = arith.constant 0 : index
    %202 = vector.load %arg3[%c1_61, %c0_62, %c0_63] : memref<2x1x128xf32, #tpu.memory_space<vmem>>, vector<1x1x128xf32>
    %203 = vector.shape_cast %202 : vector<1x1x128xf32> to vector<1x128xf32>
    %204 = vector.broadcast %203 : vector<1x128xf32> to vector<64x128xf32>
    %205 = arith.addf %201, %204 : vector<64x128xf32>
    %c0_64 = arith.constant 0 : index
    %c0_65 = arith.constant 0 : index
    %206 = vector.load %arg10[%c0_64, %c0_65] : memref<64x128xf32, #tpu.memory_space<vmem>>, vector<64x128xf32>
    tpu.vector_store %arg10[%c0_64, %c0_65], %205 {strides = array<i32>} : memref<64x128xf32, #tpu.memory_space<vmem>>, vector<64x128xf32>,
    %c1_66 = arith.constant 1 : index
    %c0_67 = arith.constant 0 : index
    %c0_68 = arith.constant 0 : index
    %207 = vector.load %arg2[%c1_66, %c0_67, %c0_68] : memref<2x32x128xf32, #tpu.memory_space<vmem>>, vector<1x32x128xf32>
    %208 = vector.shape_cast %207 : vector<1x32x128xf32> to vector<32x128xf32>
    %cst_69 = arith.constant 0.000000e+00 : f32
    %209 = vector.broadcast %cst_69 : f32 to vector<8x32xf32>
    %c0_i32_70 = arith.constant 0 : i32
    %c8_i32_71 = arith.constant 8 : i32
    %210 = arith.muli %c0_i32_70, %c8_i32_71 : i32
    %211 = tpu.assume_multiple %210, 8 : i32
    %212 = arith.index_cast %211 : i32 to index
    %c0_72 = arith.constant 0 : index
    %213 = vector.load %arg10[%212, %c0_72] : memref<64x128xf32, #tpu.memory_space<vmem>>, vector<8x128xf32>
    %cst_73 = arith.constant dense<0.000000e+00> : vector<8x128xf32>
    %214 = tpu.matmul %209, %208, %cst_73 {dimension_numbers = #tpu.dot_dimension_numbers<[1], [0], [0], [1], [0, 0, 1, 1], [], []>} : vector<8x32xf32>, vector<32x128xf32>, vector<8x128xf32> -> vector<8x128xf32>
    %215 = arith.addf %213, %214 : vector<8x128xf32>
    %216 = arith.negf %215 : vector<8x128xf32>
    %217 = math.exp %216 : vector<8x128xf32>
    %cst_74 = arith.constant 1.000000e+00 : f32
    %218 = vector.broadcast %cst_74 : f32 to vector<8x128xf32>
    %219 = arith.addf %218, %217 : vector<8x128xf32>
    %220 = arith.divf %218, %219 : vector<8x128xf32>
    %221 = math.tanh %215 : vector<8x128xf32>
    %222 = vector.extract_strided_slice %220 {offsets = [0, 0], sizes = [8, 32], strides = [1, 1]} : vector<8x128xf32> to vector<8x32xf32>
    %223 = vector.extract_strided_slice %220 {offsets = [0, 32], sizes = [8, 32], strides = [1, 1]} : vector<8x128xf32> to vector<8x32xf32>
    %224 = vector.extract_strided_slice %221 {offsets = [0, 64], sizes = [8, 32], strides = [1, 1]} : vector<8x128xf32> to vector<8x32xf32>
    %225 = vector.extract_strided_slice %220 {offsets = [0, 96], sizes = [8, 32], strides = [1, 1]} : vector<8x128xf32> to vector<8x32xf32>
    %226 = arith.mulf %223, %209 : vector<8x32xf32>
    %227 = arith.mulf %222, %224 : vector<8x32xf32>
    %228 = arith.addf %226, %227 : vector<8x32xf32>
    %229 = math.tanh %228 : vector<8x32xf32>
    %230 = arith.mulf %225, %229 : vector<8x32xf32>
    %c1_i32_75 = arith.constant 1 : i32
    %231 = arith.addi %c0_i32_70, %c1_i32_75 : i32
    %232 = vector.broadcast %231 : i32 to vector<8x1xi32>
    %233 = arith.cmpi eq, %0, %232 : vector<8x1xi32>
    %234 = vector.shape_cast %233 : vector<8x1xi1> to vector<8x1xi1>
    %235 = vector.broadcast %234 : vector<8x1xi1> to vector<8x32xi1>
    %236 = arith.select %235, %230, %1 : vector<8x32xi1>, vector<8x32xf32>
    %c1_i32_76 = arith.constant 1 : i32
    %c8_i32_77 = arith.constant 8 : i32
    %237 = arith.muli %c1_i32_76, %c8_i32_77 : i32
    %238 = tpu.assume_multiple %237, 8 : i32
    %239 = arith.index_cast %238 : i32 to index
    %c0_78 = arith.constant 0 : index
    %240 = vector.load %arg10[%239, %c0_78] : memref<64x128xf32, #tpu.memory_space<vmem>>, vector<8x128xf32>
    %cst_79 = arith.constant dense<0.000000e+00> : vector<8x128xf32>
    %241 = tpu.matmul %230, %208, %cst_79 {dimension_numbers = #tpu.dot_dimension_numbers<[1], [0], [0], [1], [0, 0, 1, 1], [], []>} : vector<8x32xf32>, vector<32x128xf32>, vector<8x128xf32> -> vector<8x128xf32>
    %242 = arith.addf %240, %241 : vector<8x128xf32>
    %243 = arith.negf %242 : vector<8x128xf32>
    %244 = math.exp %243 : vector<8x128xf32>
    %cst_80 = arith.constant 1.000000e+00 : f32
    %245 = vector.broadcast %cst_80 : f32 to vector<8x128xf32>
    %246 = arith.addf %245, %244 : vector<8x128xf32>
    %247 = arith.divf %245, %246 : vector<8x128xf32>
    %248 = math.tanh %242 : vector<8x128xf32>
    %249 = vector.extract_strided_slice %247 {offsets = [0, 0], sizes = [8, 32], strides = [1, 1]} : vector<8x128xf32> to vector<8x32xf32>
    %250 = vector.extract_strided_slice %247 {offsets = [0, 32], sizes = [8, 32], strides = [1, 1]} : vector<8x128xf32> to vector<8x32xf32>
    %251 = vector.extract_strided_slice %248 {offsets = [0, 64], sizes = [8, 32], strides = [1, 1]} : vector<8x128xf32> to vector<8x32xf32>
    %252 = vector.extract_strided_slice %247 {offsets = [0, 96], sizes = [8, 32], strides = [1, 1]} : vector<8x128xf32> to vector<8x32xf32>
    %253 = arith.mulf %250, %228 : vector<8x32xf32>
    %254 = arith.mulf %249, %251 : vector<8x32xf32>
    %255 = arith.addf %253, %254 : vector<8x32xf32>
    %256 = math.tanh %255 : vector<8x32xf32>
    %257 = arith.mulf %252, %256 : vector<8x32xf32>
    %c1_i32_81 = arith.constant 1 : i32
    %258 = arith.addi %c1_i32_76, %c1_i32_81 : i32
    %259 = vector.broadcast %258 : i32 to vector<8x1xi32>
    %260 = arith.cmpi eq, %0, %259 : vector<8x1xi32>
    %261 = vector.shape_cast %260 : vector<8x1xi1> to vector<8x1xi1>
    %262 = vector.broadcast %261 : vector<8x1xi1> to vector<8x32xi1>
    %263 = arith.select %262, %257, %236 : vector<8x32xi1>, vector<8x32xf32>
    %c2_i32_82 = arith.constant 2 : i32
    %c8_i32_83 = arith.constant 8 : i32
    %264 = arith.muli %c2_i32_82, %c8_i32_83 : i32
    %265 = tpu.assume_multiple %264, 8 : i32
    %266 = arith.index_cast %265 : i32 to index
    %c0_84 = arith.constant 0 : index
    %267 = vector.load %arg10[%266, %c0_84] : memref<64x128xf32, #tpu.memory_space<vmem>>, vector<8x128xf32>
    %cst_85 = arith.constant dense<0.000000e+00> : vector<8x128xf32>
    %268 = tpu.matmul %257, %208, %cst_85 {dimension_numbers = #tpu.dot_dimension_numbers<[1], [0], [0], [1], [0, 0, 1, 1], [], []>} : vector<8x32xf32>, vector<32x128xf32>, vector<8x128xf32> -> vector<8x128xf32>
    %269 = arith.addf %267, %268 : vector<8x128xf32>
    %270 = arith.negf %269 : vector<8x128xf32>
    %271 = math.exp %270 : vector<8x128xf32>
    %cst_86 = arith.constant 1.000000e+00 : f32
    %272 = vector.broadcast %cst_86 : f32 to vector<8x128xf32>
    %273 = arith.addf %272, %271 : vector<8x128xf32>
    %274 = arith.divf %272, %273 : vector<8x128xf32>
    %275 = math.tanh %269 : vector<8x128xf32>
    %276 = vector.extract_strided_slice %274 {offsets = [0, 0], sizes = [8, 32], strides = [1, 1]} : vector<8x128xf32> to vector<8x32xf32>
    %277 = vector.extract_strided_slice %274 {offsets = [0, 32], sizes = [8, 32], strides = [1, 1]} : vector<8x128xf32> to vector<8x32xf32>
    %278 = vector.extract_strided_slice %275 {offsets = [0, 64], sizes = [8, 32], strides = [1, 1]} : vector<8x128xf32> to vector<8x32xf32>
    %279 = vector.extract_strided_slice %274 {offsets = [0, 96], sizes = [8, 32], strides = [1, 1]} : vector<8x128xf32> to vector<8x32xf32>
    %280 = arith.mulf %277, %255 : vector<8x32xf32>
    %281 = arith.mulf %276, %278 : vector<8x32xf32>
    %282 = arith.addf %280, %281 : vector<8x32xf32>
    %283 = math.tanh %282 : vector<8x32xf32>
    %284 = arith.mulf %279, %283 : vector<8x32xf32>
    %c1_i32_87 = arith.constant 1 : i32
    %285 = arith.addi %c2_i32_82, %c1_i32_87 : i32
    %286 = vector.broadcast %285 : i32 to vector<8x1xi32>
    %287 = arith.cmpi eq, %0, %286 : vector<8x1xi32>
    %288 = vector.shape_cast %287 : vector<8x1xi1> to vector<8x1xi1>
    %289 = vector.broadcast %288 : vector<8x1xi1> to vector<8x32xi1>
    %290 = arith.select %289, %284, %263 : vector<8x32xi1>, vector<8x32xf32>
    %c3_i32_88 = arith.constant 3 : i32
    %c8_i32_89 = arith.constant 8 : i32
    %291 = arith.muli %c3_i32_88, %c8_i32_89 : i32
    %292 = tpu.assume_multiple %291, 8 : i32
    %293 = arith.index_cast %292 : i32 to index
    %c0_90 = arith.constant 0 : index
    %294 = vector.load %arg10[%293, %c0_90] : memref<64x128xf32, #tpu.memory_space<vmem>>, vector<8x128xf32>
    %cst_91 = arith.constant dense<0.000000e+00> : vector<8x128xf32>
    %295 = tpu.matmul %284, %208, %cst_91 {dimension_numbers = #tpu.dot_dimension_numbers<[1], [0], [0], [1], [0, 0, 1, 1], [], []>} : vector<8x32xf32>, vector<32x128xf32>, vector<8x128xf32> -> vector<8x128xf32>
    %296 = arith.addf %294, %295 : vector<8x128xf32>
    %297 = arith.negf %296 : vector<8x128xf32>
    %298 = math.exp %297 : vector<8x128xf32>
    %cst_92 = arith.constant 1.000000e+00 : f32
    %299 = vector.broadcast %cst_92 : f32 to vector<8x128xf32>
    %300 = arith.addf %299, %298 : vector<8x128xf32>
    %301 = arith.divf %299, %300 : vector<8x128xf32>
    %302 = math.tanh %296 : vector<8x128xf32>
    %303 = vector.extract_strided_slice %301 {offsets = [0, 0], sizes = [8, 32], strides = [1, 1]} : vector<8x128xf32> to vector<8x32xf32>
    %304 = vector.extract_strided_slice %301 {offsets = [0, 32], sizes = [8, 32], strides = [1, 1]} : vector<8x128xf32> to vector<8x32xf32>
    %305 = vector.extract_strided_slice %302 {offsets = [0, 64], sizes = [8, 32], strides = [1, 1]} : vector<8x128xf32> to vector<8x32xf32>
    %306 = vector.extract_strided_slice %301 {offsets = [0, 96], sizes = [8, 32], strides = [1, 1]} : vector<8x128xf32> to vector<8x32xf32>
    %307 = arith.mulf %304, %282 : vector<8x32xf32>
    %308 = arith.mulf %303, %305 : vector<8x32xf32>
    %309 = arith.addf %307, %308 : vector<8x32xf32>
    %310 = math.tanh %309 : vector<8x32xf32>
    %311 = arith.mulf %306, %310 : vector<8x32xf32>
    %c1_i32_93 = arith.constant 1 : i32
    %312 = arith.addi %c3_i32_88, %c1_i32_93 : i32
    %313 = vector.broadcast %312 : i32 to vector<8x1xi32>
    %314 = arith.cmpi eq, %0, %313 : vector<8x1xi32>
    %315 = vector.shape_cast %314 : vector<8x1xi1> to vector<8x1xi1>
    %316 = vector.broadcast %315 : vector<8x1xi1> to vector<8x32xi1>
    %317 = arith.select %316, %311, %290 : vector<8x32xi1>, vector<8x32xf32>
    %c4_i32_94 = arith.constant 4 : i32
    %c8_i32_95 = arith.constant 8 : i32
    %318 = arith.muli %c4_i32_94, %c8_i32_95 : i32
    %319 = tpu.assume_multiple %318, 8 : i32
    %320 = arith.index_cast %319 : i32 to index
    %c0_96 = arith.constant 0 : index
    %321 = vector.load %arg10[%320, %c0_96] : memref<64x128xf32, #tpu.memory_space<vmem>>, vector<8x128xf32>
    %cst_97 = arith.constant dense<0.000000e+00> : vector<8x128xf32>
    %322 = tpu.matmul %311, %208, %cst_97 {dimension_numbers = #tpu.dot_dimension_numbers<[1], [0], [0], [1], [0, 0, 1, 1], [], []>} : vector<8x32xf32>, vector<32x128xf32>, vector<8x128xf32> -> vector<8x128xf32>
    %323 = arith.addf %321, %322 : vector<8x128xf32>
    %324 = arith.negf %323 : vector<8x128xf32>
    %325 = math.exp %324 : vector<8x128xf32>
    %cst_98 = arith.constant 1.000000e+00 : f32
    %326 = vector.broadcast %cst_98 : f32 to vector<8x128xf32>
    %327 = arith.addf %326, %325 : vector<8x128xf32>
    %328 = arith.divf %326, %327 : vector<8x128xf32>
    %329 = math.tanh %323 : vector<8x128xf32>
    %330 = vector.extract_strided_slice %328 {offsets = [0, 0], sizes = [8, 32], strides = [1, 1]} : vector<8x128xf32> to vector<8x32xf32>
    %331 = vector.extract_strided_slice %328 {offsets = [0, 32], sizes = [8, 32], strides = [1, 1]} : vector<8x128xf32> to vector<8x32xf32>
    %332 = vector.extract_strided_slice %329 {offsets = [0, 64], sizes = [8, 32], strides = [1, 1]} : vector<8x128xf32> to vector<8x32xf32>
    %333 = vector.extract_strided_slice %328 {offsets = [0, 96], sizes = [8, 32], strides = [1, 1]} : vector<8x128xf32> to vector<8x32xf32>
    %334 = arith.mulf %331, %309 : vector<8x32xf32>
    %335 = arith.mulf %330, %332 : vector<8x32xf32>
    %336 = arith.addf %334, %335 : vector<8x32xf32>
    %337 = math.tanh %336 : vector<8x32xf32>
    %338 = arith.mulf %333, %337 : vector<8x32xf32>
    %c1_i32_99 = arith.constant 1 : i32
    %339 = arith.addi %c4_i32_94, %c1_i32_99 : i32
    %340 = vector.broadcast %339 : i32 to vector<8x1xi32>
    %341 = arith.cmpi eq, %0, %340 : vector<8x1xi32>
    %342 = vector.shape_cast %341 : vector<8x1xi1> to vector<8x1xi1>
    %343 = vector.broadcast %342 : vector<8x1xi1> to vector<8x32xi1>
    %344 = arith.select %343, %338, %317 : vector<8x32xi1>, vector<8x32xf32>
    %c5_i32_100 = arith.constant 5 : i32
    %c8_i32_101 = arith.constant 8 : i32
    %345 = arith.muli %c5_i32_100, %c8_i32_101 : i32
    %346 = tpu.assume_multiple %345, 8 : i32
    %347 = arith.index_cast %346 : i32 to index
    %c0_102 = arith.constant 0 : index
    %348 = vector.load %arg10[%347, %c0_102] : memref<64x128xf32, #tpu.memory_space<vmem>>, vector<8x128xf32>
    %cst_103 = arith.constant dense<0.000000e+00> : vector<8x128xf32>
    %349 = tpu.matmul %338, %208, %cst_103 {dimension_numbers = #tpu.dot_dimension_numbers<[1], [0], [0], [1], [0, 0, 1, 1], [], []>} : vector<8x32xf32>, vector<32x128xf32>, vector<8x128xf32> -> vector<8x128xf32>
    %350 = arith.addf %348, %349 : vector<8x128xf32>
    %351 = arith.negf %350 : vector<8x128xf32>
    %352 = math.exp %351 : vector<8x128xf32>
    %cst_104 = arith.constant 1.000000e+00 : f32
    %353 = vector.broadcast %cst_104 : f32 to vector<8x128xf32>
    %354 = arith.addf %353, %352 : vector<8x128xf32>
    %355 = arith.divf %353, %354 : vector<8x128xf32>
    %356 = math.tanh %350 : vector<8x128xf32>
    %357 = vector.extract_strided_slice %355 {offsets = [0, 0], sizes = [8, 32], strides = [1, 1]} : vector<8x128xf32> to vector<8x32xf32>
    %358 = vector.extract_strided_slice %355 {offsets = [0, 32], sizes = [8, 32], strides = [1, 1]} : vector<8x128xf32> to vector<8x32xf32>
    %359 = vector.extract_strided_slice %356 {offsets = [0, 64], sizes = [8, 32], strides = [1, 1]} : vector<8x128xf32> to vector<8x32xf32>
    %360 = vector.extract_strided_slice %355 {offsets = [0, 96], sizes = [8, 32], strides = [1, 1]} : vector<8x128xf32> to vector<8x32xf32>
    %361 = arith.mulf %358, %336 : vector<8x32xf32>
    %362 = arith.mulf %357, %359 : vector<8x32xf32>
    %363 = arith.addf %361, %362 : vector<8x32xf32>
    %364 = math.tanh %363 : vector<8x32xf32>
    %365 = arith.mulf %360, %364 : vector<8x32xf32>
    %c1_i32_105 = arith.constant 1 : i32
    %366 = arith.addi %c5_i32_100, %c1_i32_105 : i32
    %367 = vector.broadcast %366 : i32 to vector<8x1xi32>
    %368 = arith.cmpi eq, %0, %367 : vector<8x1xi32>
    %369 = vector.shape_cast %368 : vector<8x1xi1> to vector<8x1xi1>
    %370 = vector.broadcast %369 : vector<8x1xi1> to vector<8x32xi1>
    %371 = arith.select %370, %365, %344 : vector<8x32xi1>, vector<8x32xf32>
    %c6_i32_106 = arith.constant 6 : i32
    %c8_i32_107 = arith.constant 8 : i32
    %372 = arith.muli %c6_i32_106, %c8_i32_107 : i32
    %373 = tpu.assume_multiple %372, 8 : i32
    %374 = arith.index_cast %373 : i32 to index
    %c0_108 = arith.constant 0 : index
    %375 = vector.load %arg10[%374, %c0_108] : memref<64x128xf32, #tpu.memory_space<vmem>>, vector<8x128xf32>
    %cst_109 = arith.constant dense<0.000000e+00> : vector<8x128xf32>
    %376 = tpu.matmul %365, %208, %cst_109 {dimension_numbers = #tpu.dot_dimension_numbers<[1], [0], [0], [1], [0, 0, 1, 1], [], []>} : vector<8x32xf32>, vector<32x128xf32>, vector<8x128xf32> -> vector<8x128xf32>
    %377 = arith.addf %375, %376 : vector<8x128xf32>
    %378 = arith.negf %377 : vector<8x128xf32>
    %379 = math.exp %378 : vector<8x128xf32>
    %cst_110 = arith.constant 1.000000e+00 : f32
    %380 = vector.broadcast %cst_110 : f32 to vector<8x128xf32>
    %381 = arith.addf %380, %379 : vector<8x128xf32>
    %382 = arith.divf %380, %381 : vector<8x128xf32>
    %383 = math.tanh %377 : vector<8x128xf32>
    %384 = vector.extract_strided_slice %382 {offsets = [0, 0], sizes = [8, 32], strides = [1, 1]} : vector<8x128xf32> to vector<8x32xf32>
    %385 = vector.extract_strided_slice %382 {offsets = [0, 32], sizes = [8, 32], strides = [1, 1]} : vector<8x128xf32> to vector<8x32xf32>
    %386 = vector.extract_strided_slice %383 {offsets = [0, 64], sizes = [8, 32], strides = [1, 1]} : vector<8x128xf32> to vector<8x32xf32>
    %387 = vector.extract_strided_slice %382 {offsets = [0, 96], sizes = [8, 32], strides = [1, 1]} : vector<8x128xf32> to vector<8x32xf32>
    %388 = arith.mulf %385, %363 : vector<8x32xf32>
    %389 = arith.mulf %384, %386 : vector<8x32xf32>
    %390 = arith.addf %388, %389 : vector<8x32xf32>
    %391 = math.tanh %390 : vector<8x32xf32>
    %392 = arith.mulf %387, %391 : vector<8x32xf32>
    %c1_i32_111 = arith.constant 1 : i32
    %393 = arith.addi %c6_i32_106, %c1_i32_111 : i32
    %394 = vector.broadcast %393 : i32 to vector<8x1xi32>
    %395 = arith.cmpi eq, %0, %394 : vector<8x1xi32>
    %396 = vector.shape_cast %395 : vector<8x1xi1> to vector<8x1xi1>
    %397 = vector.broadcast %396 : vector<8x1xi1> to vector<8x32xi1>
    %398 = arith.select %397, %392, %371 : vector<8x32xi1>, vector<8x32xf32>
    %c7_i32_112 = arith.constant 7 : i32
    %c8_i32_113 = arith.constant 8 : i32
    %399 = arith.muli %c7_i32_112, %c8_i32_113 : i32
    %400 = tpu.assume_multiple %399, 8 : i32
    %401 = arith.index_cast %400 : i32 to index
    %c0_114 = arith.constant 0 : index
    %402 = vector.load %arg10[%401, %c0_114] : memref<64x128xf32, #tpu.memory_space<vmem>>, vector<8x128xf32>
    %cst_115 = arith.constant dense<0.000000e+00> : vector<8x128xf32>
    %403 = tpu.matmul %392, %208, %cst_115 {dimension_numbers = #tpu.dot_dimension_numbers<[1], [0], [0], [1], [0, 0, 1, 1], [], []>} : vector<8x32xf32>, vector<32x128xf32>, vector<8x128xf32> -> vector<8x128xf32>
    %404 = arith.addf %402, %403 : vector<8x128xf32>
    %405 = arith.negf %404 : vector<8x128xf32>
    %406 = math.exp %405 : vector<8x128xf32>
    %cst_116 = arith.constant 1.000000e+00 : f32
    %407 = vector.broadcast %cst_116 : f32 to vector<8x128xf32>
    %408 = arith.addf %407, %406 : vector<8x128xf32>
    %409 = arith.divf %407, %408 : vector<8x128xf32>
    %410 = math.tanh %404 : vector<8x128xf32>
    %411 = vector.extract_strided_slice %409 {offsets = [0, 0], sizes = [8, 32], strides = [1, 1]} : vector<8x128xf32> to vector<8x32xf32>
    %412 = vector.extract_strided_slice %409 {offsets = [0, 32], sizes = [8, 32], strides = [1, 1]} : vector<8x128xf32> to vector<8x32xf32>
    %413 = vector.extract_strided_slice %410 {offsets = [0, 64], sizes = [8, 32], strides = [1, 1]} : vector<8x128xf32> to vector<8x32xf32>
    %414 = vector.extract_strided_slice %409 {offsets = [0, 96], sizes = [8, 32], strides = [1, 1]} : vector<8x128xf32> to vector<8x32xf32>
    %415 = arith.mulf %412, %390 : vector<8x32xf32>
    %416 = arith.mulf %411, %413 : vector<8x32xf32>
    %417 = arith.addf %415, %416 : vector<8x32xf32>
    %418 = math.tanh %417 : vector<8x32xf32>
    %419 = arith.mulf %414, %418 : vector<8x32xf32>
    %c1_i32_117 = arith.constant 1 : i32
    %420 = arith.addi %c7_i32_112, %c1_i32_117 : i32
    %421 = vector.broadcast %420 : i32 to vector<8x1xi32>
    %422 = arith.cmpi eq, %0, %421 : vector<8x1xi32>
    %423 = vector.shape_cast %422 : vector<8x1xi1> to vector<8x1xi1>
    %424 = vector.broadcast %423 : vector<8x1xi1> to vector<8x32xi1>
    %425 = arith.select %424, %419, %398 : vector<8x32xi1>, vector<8x32xf32>
    %c8_i32_118 = arith.constant 8 : i32
    %c0_119 = arith.constant 0 : index
    %c0_120 = arith.constant 0 : index
    %426 = vector.load %arg6[%c0_119, %c0_120] : memref<32x128xf32, #tpu.memory_space<vmem>>, vector<32x128xf32>
    %cst_121 = arith.constant dense<0.000000e+00> : vector<8x128xf32>
    %427 = tpu.matmul %425, %426, %cst_121 {dimension_numbers = #tpu.dot_dimension_numbers<[1], [0], [0], [1], [0, 0, 1, 1], [], []>} : vector<8x32xf32>, vector<32x128xf32>, vector<8x128xf32> -> vector<8x128xf32>
    %c0_122 = arith.constant 0 : index
    %c0_123 = arith.constant 0 : index
    %428 = vector.load %arg5[%c0_122, %c0_123] : memref<8x100xf32, #tpu.memory_space<vmem>>, vector<8x100xf32>
    %c0_124 = arith.constant 0 : index
    %c0_125 = arith.constant 0 : index
    %429 = vector.load %arg7[%c0_124, %c0_125] : memref<100x128xf32, #tpu.memory_space<vmem>>, vector<100x128xf32>
    %cst_126 = arith.constant dense<0.000000e+00> : vector<8x128xf32>
    %430 = tpu.matmul %428, %429, %cst_126 {dimension_numbers = #tpu.dot_dimension_numbers<[1], [0], [0], [1], [0, 0, 1, 1], [], []>} : vector<8x100xf32>, vector<100x128xf32>, vector<8x128xf32> -> vector<8x128xf32>
    %431 = arith.addf %427, %430 : vector<8x128xf32>
    %c0_127 = arith.constant 0 : index
    %c0_128 = arith.constant 0 : index
    %432 = vector.load %arg8[%c0_127, %c0_128] : memref<1x128xf32, #tpu.memory_space<vmem>>, vector<1x128xf32>
    %433 = vector.broadcast %432 : vector<1x128xf32> to vector<8x128xf32>
    %434 = arith.addf %431, %433 : vector<8x128xf32>
    %c0_129 = arith.constant 0 : index
    %c0_130 = arith.constant 0 : index
    %435 = vector.load %arg9[%c0_129, %c0_130] : memref<8x128xf32, #tpu.memory_space<vmem>>, vector<8x128xf32>
    tpu.vector_store %arg9[%c0_129, %c0_130], %434 {strides = array<i32>} : memref<8x128xf32, #tpu.memory_space<vmem>>, vector<8x128xf32>,
    return
  }
}

</mosaic_0001>

<llo_original>
// kernel: sentiment_lstm_forward.1
$region0: #{sentiment_lstm_forward.1}
  #allocation0 [shape = 'u32[]', space=smem, size = 0x4, offset = 0x4, fixed_abs, tag = 'smem constant byte address 0x4 - core index']
  #allocation1 [shape = 'u32[144,128]{1,0:T(1,128)}', space=vmem, size = 0x12000, scoped, tag = 'internal scratch']
  #allocation2 [shape = 'f32[64,128]{1,0:T(8,128)}', space=vmem, size = 0x8000, scoped, tag = 'scratch operand']
  #allocation3 [shape = 'f32[64,32]{1,0:T(8,128)}', space=vmem, size = 0x8000, scoped, tag = 'scratch operand']
  %s0 = inlined_call_operand.vmem [shape: f32[64,32], index: 0, kind: input, shape index: {}]
  %s1 = inlined_call_operand.vmem [shape: f32[2,32,128], index: 1, kind: input, shape index: {}]
  %s2 = inlined_call_operand.vmem [shape: f32[2,32,128], index: 2, kind: input, shape index: {}]
  %s3 = inlined_call_operand.vmem [shape: f32[2,1,128], index: 3, kind: input, shape index: {}]
  %s4 = inlined_call_operand.vmem [shape: s32[8,1], index: 4, kind: input, shape index: {}]
  %s5 = inlined_call_operand.vmem [shape: f32[8,100], index: 5, kind: input, shape index: {}]
  %s6 = inlined_call_operand.vmem [shape: f32[32,128], index: 6, kind: input, shape index: {}]
  %s7 = inlined_call_operand.vmem [shape: f32[100,128], index: 7, kind: input, shape index: {}]
  %s8 = inlined_call_operand.vmem [shape: f32[1,128], index: 8, kind: input, shape index: {}]
  %s9 = inlined_call_operand.vmem [shape: f32[8,128], index: 9, kind: output, shape index: {}]
  %s10 = sld [smem:[#allocation0]]
  $region46: #{sentiment_lstm_forward.1} parent=0
    _
  %s12 = ssub.s32 1, %s10
  %s13 = scalar_select 0, %s12, %s10
  // Predicated region
  $region2: #{sentiment_lstm_forward.1} parent=0 // pred_check
    _
  $region3: #{sentiment_lstm_forward.1} parent=0 // pred_check_branch
    %15 = sbr.rel (0) target = $region5
  $region4: #{sentiment_lstm_forward.1} parent=0 // pred_region
    _
  $region5: #{sentiment_lstm_forward.1} parent=0 // pred_fallthru
    _
  // Predicated region
  $region6: #{sentiment_lstm_forward.1} parent=0 // pred_check
    _
  $region7: #{sentiment_lstm_forward.1} parent=0 // pred_check_branch
    %17 = sbr.rel (0) target = $region9
  $region8: #{sentiment_lstm_forward.1} parent=0 // pred_region
    _
  $region9: #{sentiment_lstm_forward.1} parent=0 // pred_fallthru
    _
  // Predicated region
  $region10: #{sentiment_lstm_forward.1} parent=0 // pred_check
    _
  $region11: #{sentiment_lstm_forward.1} parent=0 // pred_check_branch
    %19 = sbr.rel (0) target = $region13
  $region12: #{sentiment_lstm_forward.1} parent=0 // pred_region
    _
  $region13: #{sentiment_lstm_forward.1} parent=0 // pred_fallthru
    _
  // Predicated region
  $region14: #{sentiment_lstm_forward.1} parent=0 // pred_check
    _
  $region15: #{sentiment_lstm_forward.1} parent=0 // pred_check_branch
    %21 = sbr.rel (0) target = $region17
  $region16: #{sentiment_lstm_forward.1} parent=0 // pred_region
    _
  $region17: #{sentiment_lstm_forward.1} parent=0 // pred_fallthru
    _
  // Predicated region
  $region18: #{sentiment_lstm_forward.1} parent=0 // pred_check
    _
  $region19: #{sentiment_lstm_forward.1} parent=0 // pred_check_branch
    %23 = sbr.rel (0) target = $region21
  $region20: #{sentiment_lstm_forward.1} parent=0 // pred_region
    _
  $region21: #{sentiment_lstm_forward.1} parent=0 // pred_fallthru
    _
  // Predicated region
  $region22: #{sentiment_lstm_forward.1} parent=0 // pred_check
    _
  $region23: #{sentiment_lstm_forward.1} parent=0 // pred_check_branch
    %25 = sbr.rel (0) target = $region25
  $region24: #{sentiment_lstm_forward.1} parent=0 // pred_region
    _
  $region25: #{sentiment_lstm_forward.1} parent=0 // pred_fallthru
    _
  // Predicated region
  $region26: #{sentiment_lstm_forward.1} parent=0 // pred_check
    _
  $region27: #{sentiment_lstm_forward.1} parent=0 // pred_check_branch
    %27 = sbr.rel (0) target = $region29
  $region28: #{sentiment_lstm_forward.1} parent=0 // pred_region
    _
  $region29: #{sentiment_lstm_forward.1} parent=0 // pred_fallthru
    _
  // Predicated region
  $region30: #{sentiment_lstm_forward.1} parent=0 // pred_check
    _
  $region31: #{sentiment_lstm_forward.1} parent=0 // pred_check_branch
    %29 = sbr.rel (0) target = $region33
  $region32: #{sentiment_lstm_forward.1} parent=0 // pred_region
    _
  $region33: #{sentiment_lstm_forward.1} parent=0 // pred_fallthru
    _
  // Predicated region
  $region34: #{sentiment_lstm_forward.1} parent=0 // pred_check
    _
  $region35: #{sentiment_lstm_forward.1} parent=0 // pred_check_branch
    %31 = sbr.rel (0) target = $region37
  $region36: #{sentiment_lstm_forward.1} parent=0 // pred_region
    _
  $region37: #{sentiment_lstm_forward.1} parent=0 // pred_fallthru
    _
  %v32 = vld [vmem:[%s4] sm:$0xff]
  %v33 = vld [vmem:[%s0] sm:$0xff]
  %v34 = vld [vmem:[%s0 + $0x8] sm:$0xff]
  %v35 = vld [vmem:[%s0 + $0x10] sm:$0xff]
  %v36 = vld [vmem:[%s0 + $0x18] sm:$0xff]
  %v37 = vld [vmem:[%s0 + $0x20] sm:$0xff]
  %v38 = vld [vmem:[%s0 + $0x28] sm:$0xff]
  %v39 = vld [vmem:[%s0 + $0x30] sm:$0xff]
  %v40 = vld [vmem:[%s0 + $0x38] sm:$0xff]
  %v41 = vld [vmem:[%s1] sm:$0xff]
  %v42 = vld [vmem:[%s1 + $0x8] sm:$0xff]
  %v43 = vld [vmem:[%s1 + $0x10] sm:$0xff]
  %v44 = vld [vmem:[%s1 + $0x18] sm:$0xff]
  %v45 = vld [vmem:[%s3] sm:$0x1]
  %v47 = vlaneseq
  %v48 = vshrl.u32 %v47, 7
  %v49 = vsub.s32 0, %v48
  %v50 = vrot.slane %v45, %v49
  %vm52 = vcmask 261120
  %v54 = vsel %vm52, %v33, 0
  %v57 = vsel %vm52, %v34, 0
  %v60 = vsel %vm52, %v35, 0
  %v63 = vsel %vm52, %v36, 0
  %v66 = vsel %vm52, %v37, 0
  %v69 = vsel %vm52, %v38, 0
  %v72 = vsel %vm52, %v39, 0
  %v75 = vsel %vm52, %v40, 0
  %77 = vmatprep.subr.mxu0 0.0
  %78 = vmatpush1.msra.mxu0 %v41
  %79 = vmatprep.subr.mxu0 0.0
  %80 = vmatpush1.msra.mxu0 %v42
  %81 = vmatprep.subr.mxu0 0.0
  %82 = vmatpush1.msra.mxu0 %v43
  %83 = vmatprep.subr.mxu0 0.0
  %84 = vmatpush1.msra.mxu0 %v44
  %85 = vmatprep.subr.mxu0 0.0
  %86 = vmatpush1.msra.mxu0 0.0
  %87 = vmatprep.subr.mxu0 0.0
  %88 = vmatpush1.msra.mxu0 0.0
  %89 = vmatprep.subr.mxu0 0.0
  %90 = vmatpush1.msra.mxu0 0.0
  %91 = vmatprep.subr.mxu0 0.0
  %92 = vmatpush1.msra.mxu0 0.0
  %93 = vmatprep.subr.mxu0 0.0
  %94 = vmatpush1.msra.mxu0 0.0
  %95 = vmatprep.subr.mxu0 0.0
  %96 = vmatpush1.msra.mxu0 0.0
  %97 = vmatprep.subr.mxu0 0.0
  %98 = vmatpush1.msra.mxu0 0.0
  %99 = vmatprep.subr.mxu0 0.0
  %100 = vmatpush1.msra.mxu0 0.0
  %101 = vmatprep.subr.mxu0 0.0
  %102 = vmatpush1.msra.mxu0 0.0
  %103 = vmatprep.subr.mxu0 0.0
  %104 = vmatpush1.msra.mxu0 0.0
  %105 = vmatprep.subr.mxu0 0.0
  %106 = vmatpush1.msra.mxu0 0.0
  %107 = vmatprep.subr.mxu0 0.0
  %108 = vmatpush1.msra.mxu0 0.0
  %109 = vmatprep.subr.mxu0 0.0
  %110 = vmatpush1.msra.mxu0 0.0
  %111 = vmatprep.subr.mxu0 0.0
  %112 = vmatpush1.msra.mxu0 0.0
  %113 = vmatprep.subr.mxu0 0.0
  %114 = vmatpush1.msra.mxu0 0.0
  %115 = vmatprep.subr.mxu0 0.0
  %116 = vmatpush1.msra.mxu0 0.0
  %117 = vmatprep.subr.mxu0 0.0
  %118 = vmatpush1.msra.mxu0 0.0
  %119 = vmatprep.subr.mxu0 0.0
  %120 = vmatpush1.msra.mxu0 0.0
  %121 = vmatprep.subr.mxu0 0.0
  %122 = vmatpush1.msra.mxu0 0.0
  %123 = vmatprep.subr.mxu0 0.0
  %124 = vmatpush1.msra.mxu0 0.0
  %125 = vmatprep.subr.mxu0 0.0
  %126 = vmatpush1.msra.mxu0 0.0
  %127 = vmatprep.subr.mxu0 0.0
  %128 = vmatpush1.msra.mxu0 0.0
  %129 = vmatprep.subr.mxu0 0.0
  %130 = vmatpush1.msra.mxu0 0.0
  %131 = vmatprep.subr.mxu0 0.0
  %132 = vmatpush1.msra.mxu0 0.0
  %133 = vmatprep.subr.mxu0 0.0
  %134 = vmatpush1.msra.mxu0 0.0
  %135 = vmatprep.subr.mxu0 0.0
  %136 = vmatpush1.msra.mxu0 0.0
  %137 = vmatprep.subr.mxu0 0.0
  %138 = vmatpush1.msra.mxu0 0.0
  %139 = vmatprep.subr.mxu0 0.0
  %140 = vmatpush1.msra.mxu0 0.0
  %141 = vmatprep.mubr.f32.mxu0 0.0
  %142 = vmatmul.mubr.f32.gmra.mrb[0].mxu0 %v54
  %v143 = vpop.f32.mrb[0].mxu0
  %v144 = vadd.f32 %v50, %v143
  %v145 = vpop.f32.mrb[0].mxu0
  %146 = vmatprep.mubr.f32.mxu0 0.0
  %147 = vmatmul.mubr.f32.gmra.mrb[0].mxu0 %v57
  %v148 = vpop.f32.mrb[0].mxu0
  %v149 = vadd.f32 %v50, %v148
  %v150 = vpop.f32.mrb[0].mxu0
  %151 = vmatprep.mubr.f32.mxu0 0.0
  %152 = vmatmul.mubr.f32.gmra.mrb[0].mxu0 %v60
  %v153 = vpop.f32.mrb[0].mxu0
  %v154 = vadd.f32 %v50, %v153
  %v155 = vpop.f32.mrb[0].mxu0
  %156 = vmatprep.mubr.f32.mxu0 0.0
  %157 = vmatmul.mubr.f32.gmra.mrb[0].mxu0 %v63
  %v158 = vpop.f32.mrb[0].mxu0
  %v159 = vadd.f32 %v50, %v158
  %v160 = vpop.f32.mrb[0].mxu0
  %161 = vmatprep.mubr.f32.mxu0 0.0
  %162 = vmatmul.mubr.f32.gmra.mrb[0].mxu0 %v66
  %v163 = vpop.f32.mrb[0].mxu0
  %v164 = vadd.f32 %v50, %v163
  %v165 = vpop.f32.mrb[0].mxu0
  %166 = vmatprep.mubr.f32.mxu0 0.0
  %167 = vmatmul.mubr.f32.gmra.mrb[0].mxu0 %v69
  %v168 = vpop.f32.mrb[0].mxu0
  %v169 = vadd.f32 %v50, %v168
  %v170 = vpop.f32.mrb[0].mxu0
  %171 = vmatprep.mubr.f32.mxu0 0.0
  %172 = vmatmul.mubr.f32.gmra.mrb[0].mxu0 %v72
  %v173 = vpop.f32.mrb[0].mxu0
  %v174 = vadd.f32 %v50, %v173
  %v175 = vpop.f32.mrb[0].mxu0
  %176 = vmatprep.mubr.f32.mxu0 0.0
  %177 = vmatmul.mubr.f32.gmra.mrb[0].mxu0 %v75
  %v178 = vpop.f32.mrb[0].mxu0
  %v179 = vadd.f32 %v50, %v178
  %v180 = vpop.f32.mrb[0].mxu0
  %181 = vdwg.mxu0
  %182 = vst [vmem:[#allocation2] sm:$0xff] %v144
  %183 = vst [vmem:[#allocation2 + $0x8] sm:$0xff] %v149
  %184 = vst [vmem:[#allocation2 + $0x10] sm:$0xff] %v154
  %185 = vst [vmem:[#allocation2 + $0x18] sm:$0xff] %v159
  %186 = vst [vmem:[#allocation2 + $0x20] sm:$0xff] %v164
  %187 = vst [vmem:[#allocation2 + $0x28] sm:$0xff] %v169
  %188 = vst [vmem:[#allocation2 + $0x30] sm:$0xff] %v174
  %189 = vst [vmem:[#allocation2 + $0x38] sm:$0xff] %v179
  %v190 = vld [vmem:[%s2] sm:$0xff]
  %v191 = vld [vmem:[%s2 + $0x8] sm:$0xff]
  %v192 = vld [vmem:[%s2 + $0x10] sm:$0xff]
  %v193 = vld [vmem:[%s2 + $0x18] sm:$0xff]
  %v194 = vld [vmem:[#allocation2] sm:$0xff]
  %v196 = vsel %vm52, 0.0, 0
  %198 = vmatprep.subr.mxu0 0.0
  %199 = vmatpush1.msra.mxu0 %v190
  %200 = vmatprep.subr.mxu0 0.0
  %201 = vmatpush1.msra.mxu0 %v191
  %202 = vmatprep.subr.mxu0 0.0
  %203 = vmatpush1.msra.mxu0 %v192
  %204 = vmatprep.subr.mxu0 0.0
  %205 = vmatpush1.msra.mxu0 %v193
  %206 = vmatprep.subr.mxu0 0.0
  %207 = vmatpush1.msra.mxu0 0.0
  %208 = vmatprep.subr.mxu0 0.0
  %209 = vmatpush1.msra.mxu0 0.0
  %210 = vmatprep.subr.mxu0 0.0
  %211 = vmatpush1.msra.mxu0 0.0
  %212 = vmatprep.subr.mxu0 0.0
  %213 = vmatpush1.msra.mxu0 0.0
  %214 = vmatprep.subr.mxu0 0.0
  %215 = vmatpush1.msra.mxu0 0.0
  %216 = vmatprep.subr.mxu0 0.0
  %217 = vmatpush1.msra.mxu0 0.0
  %218 = vmatprep.subr.mxu0 0.0
  %219 = vmatpush1.msra.mxu0 0.0
  %220 = vmatprep.subr.mxu0 0.0
  %221 = vmatpush1.msra.mxu0 0.0
  %222 = vmatprep.subr.mxu0 0.0
  %223 = vmatpush1.msra.mxu0 0.0
  %224 = vmatprep.subr.mxu0 0.0
  %225 = vmatpush1.msra.mxu0 0.0
  %226 = vmatprep.subr.mxu0 0.0
  %227 = vmatpush1.msra.mxu0 0.0
  %228 = vmatprep.subr.mxu0 0.0
  %229 = vmatpush1.msra.mxu0 0.0
  %230 = vmatprep.subr.mxu0 0.0
  %231 = vmatpush1.msra.mxu0 0.0
  %232 = vmatprep.subr.mxu0 0.0
  %233 = vmatpush1.msra.mxu0 0.0
  %234 = vmatprep.subr.mxu0 0.0
  %235 = vmatpush1.msra.mxu0 0.0
  %236 = vmatprep.subr.mxu0 0.0
  %237 = vmatpush1.msra.mxu0 0.0
  %238 = vmatprep.subr.mxu0 0.0
  %239 = vmatpush1.msra.mxu0 0.0
  %240 = vmatprep.subr.mxu0 0.0
  %241 = vmatpush1.msra.mxu0 0.0
  %242 = vmatprep.subr.mxu0 0.0
  %243 = vmatpush1.msra.mxu0 0.0
  %244 = vmatprep.subr.mxu0 0.0
  %245 = vmatpush1.msra.mxu0 0.0
  %246 = vmatprep.subr.mxu0 0.0
  %247 = vmatpush1.msra.mxu0 0.0
  %248 = vmatprep.subr.mxu0 0.0
  %249 = vmatpush1.msra.mxu0 0.0
  %250 = vmatprep.subr.mxu0 0.0
  %251 = vmatpush1.msra.mxu0 0.0
  %252 = vmatprep.subr.mxu0 0.0
  %253 = vmatpush1.msra.mxu0 0.0
  %254 = vmatprep.subr.mxu0 0.0
  %255 = vmatpush1.msra.mxu0 0.0
  %256 = vmatprep.subr.mxu0 0.0
  %257 = vmatpush1.msra.mxu0 0.0
  %258 = vmatprep.subr.mxu0 0.0
  %259 = vmatpush1.msra.mxu0 0.0
  %260 = vmatprep.subr.mxu0 0.0
  %261 = vmatpush1.msra.mxu0 0.0
  %262 = vmatprep.mubr.f32.mxu0 0.0
  %263 = vmatmul.mubr.f32.gmra.mrb[0].mxu0 %v196
  %v264 = vpop.f32.mrb[0].mxu0
  %v265 = vadd.f32 0.0, %v264
  %v266 = vpop.f32.mrb[0].mxu0
  %267 = vdwg.mxu0
  %v268 = vadd.f32 %v194, %v265
  %v269 = vxor.u32 %v268, 2147483648
  %v270 = vmul.f32 %v269, 1.442695
  %v271 = vpow.pop %v270
  %v272 = vadd.f32 %v271, 1.0
  %v273 = vrcp.pop %v272
  %v274 = vmul.f32 1.0, %v273
  %v275 = vtanh.pop %v268
  %v276 = vmul.f32 %v274, 0.0
  %278 = vrot.lane.b32.xlu0 %v275, 64
  %v279 = vpop.permute.xlu0 %278
  %v281 = vmul.f32 %v274, %v279
  %283 = vrot.lane.b32.xlu0 %v281, 32
  %v284 = vpop.permute.xlu0 %283
  %v286 = vadd.f32 %v276, %v284
  %v287 = vtanh.pop %v286
  %289 = vrot.lane.b32.xlu0 %v287, 64
  %v290 = vpop.permute.xlu0 %289
  %v292 = vmul.f32 %v274, %v290
  %294 = vrot.lane.b32.xlu0 %v292, 32
  %v295 = vpop.permute.xlu0 %294
  %297 = vst.msk [vmem:[#allocation3] sm:$0xff] %vm52, %v295
  %s298 = scalar_lea.vmem [#allocation2], 8
  %v299 = vld [vmem:[%s298] sm:$0xff]
  %v300 = vsel %vm52, %v295, 0
  %302 = vmatprep.subr.mxu0 0.0
  %303 = vmatpush1.msra.mxu0 %v190
  %304 = vmatprep.subr.mxu0 0.0
  %305 = vmatpush1.msra.mxu0 %v191
  %306 = vmatprep.subr.mxu0 0.0
  %307 = vmatpush1.msra.mxu0 %v192
  %308 = vmatprep.subr.mxu0 0.0
  %309 = vmatpush1.msra.mxu0 %v193
  %310 = vmatprep.subr.mxu0 0.0
  %311 = vmatpush1.msra.mxu0 0.0
  %312 = vmatprep.subr.mxu0 0.0
  %313 = vmatpush1.msra.mxu0 0.0
  %314 = vmatprep.subr.mxu0 0.0
  %315 = vmatpush1.msra.mxu0 0.0
  %316 = vmatprep.subr.mxu0 0.0
  %317 = vmatpush1.msra.mxu0 0.0
  %318 = vmatprep.subr.mxu0 0.0
  %319 = vmatpush1.msra.mxu0 0.0
  %320 = vmatprep.subr.mxu0 0.0
  %321 = vmatpush1.msra.mxu0 0.0
  %322 = vmatprep.subr.mxu0 0.0
  %323 = vmatpush1.msra.mxu0 0.0
  %324 = vmatprep.subr.mxu0 0.0
  %325 = vmatpush1.msra.mxu0 0.0
  %326 = vmatprep.subr.mxu0 0.0
  %327 = vmatpush1.msra.mxu0 0.0
  %328 = vmatprep.subr.mxu0 0.0
  %329 = vmatpush1.msra.mxu0 0.0
  %330 = vmatprep.subr.mxu0 0.0
  %331 = vmatpush1.msra.mxu0 0.0
  %332 = vmatprep.subr.mxu0 0.0
  %333 = vmatpush1.msra.mxu0 0.0
  %334 = vmatprep.subr.mxu0 0.0
  %335 = vmatpush1.msra.mxu0 0.0
  %336 = vmatprep.subr.mxu0 0.0
  %337 = vmatpush1.msra.mxu0 0.0
  %338 = vmatprep.subr.mxu0 0.0
  %339 = vmatpush1.msra.mxu0 0.0
  %340 = vmatprep.subr.mxu0 0.0
  %341 = vmatpush1.msra.mxu0 0.0
  %342 = vmatprep.subr.mxu0 0.0
  %343 = vmatpush1.msra.mxu0 0.0
  %344 = vmatprep.subr.mxu0 0.0
  %345 = vmatpush1.msra.mxu0 0.0
  %346 = vmatprep.subr.mxu0 0.0
  %347 = vmatpush1.msra.mxu0 0.0
  %348 = vmatprep.subr.mxu0 0.0
  %349 = vmatpush1.msra.mxu0 0.0
  %350 = vmatprep.subr.mxu0 0.0
  %351 = vmatpush1.msra.mxu0 0.0
  %352 = vmatprep.subr.mxu0 0.0
  %353 = vmatpush1.msra.mxu0 0.0
  %354 = vmatprep.subr.mxu0 0.0
  %355 = vmatpush1.msra.mxu0 0.0
  %356 = vmatprep.subr.mxu0 0.0
  %357 = vmatpush1.msra.mxu0 0.0
  %358 = vmatprep.subr.mxu0 0.0
  %359 = vmatpush1.msra.mxu0 0.0
  %360 = vmatprep.subr.mxu0 0.0
  %361 = vmatpush1.msra.mxu0 0.0
  %362 = vmatprep.subr.mxu0 0.0
  %363 = vmatpush1.msra.mxu0 0.0
  %364 = vmatprep.subr.mxu0 0.0
  %365 = vmatpush1.msra.mxu0 0.0
  %366 = vmatprep.mubr.f32.mxu0 0.0
  %367 = vmatmul.mubr.f32.gmra.mrb[0].mxu0 %v300
  %v368 = vpop.f32.mrb[0].mxu0
  %v369 = vadd.f32 0.0, %v368
  %v370 = vpop.f32.mrb[0].mxu0
  %371 = vdwg.mxu0
  %v372 = vadd.f32 %v299, %v369
  %v373 = vxor.u32 %v372, 2147483648
  %v374 = vmul.f32 %v373, 1.442695
  %v375 = vpow.pop %v374
  %v376 = vadd.f32 %v375, 1.0
  %v377 = vrcp.pop %v376
  %v378 = vmul.f32 1.0, %v377
  %v379 = vtanh.pop %v372
  %v380 = vmul.f32 %v378, %v286
  %382 = vrot.lane.b32.xlu0 %v379, 64
  %v383 = vpop.permute.xlu0 %382
  %v385 = vmul.f32 %v378, %v383
  %387 = vrot.lane.b32.xlu0 %v385, 32
  %v388 = vpop.permute.xlu0 %387
  %v390 = vadd.f32 %v380, %v388
  %v391 = vtanh.pop %v390
  %393 = vrot.lane.b32.xlu0 %v391, 64
  %v394 = vpop.permute.xlu0 %393
  %v396 = vmul.f32 %v378, %v394
  %398 = vrot.lane.b32.xlu0 %v396, 32
  %v399 = vpop.permute.xlu0 %398
  %s401 = scalar_lea.vmem [#allocation3], 8
  %402 = vst.msk [vmem:[%s401] sm:$0xff] %vm52, %v399
  %s403 = scalar_lea.vmem [#allocation2], 16
  %v404 = vld [vmem:[%s403] sm:$0xff]
  %v405 = vsel %vm52, %v399, 0
  %407 = vmatprep.subr.mxu0 0.0
  %408 = vmatpush1.msra.mxu0 %v190
  %409 = vmatprep.subr.mxu0 0.0
  %410 = vmatpush1.msra.mxu0 %v191
  %411 = vmatprep.subr.mxu0 0.0
  %412 = vmatpush1.msra.mxu0 %v192
  %413 = vmatprep.subr.mxu0 0.0
  %414 = vmatpush1.msra.mxu0 %v193
  %415 = vmatprep.subr.mxu0 0.0
  %416 = vmatpush1.msra.mxu0 0.0
  %417 = vmatprep.subr.mxu0 0.0
  %418 = vmatpush1.msra.mxu0 0.0
  %419 = vmatprep.subr.mxu0 0.0
  %420 = vmatpush1.msra.mxu0 0.0
  %421 = vmatprep.subr.mxu0 0.0
  %422 = vmatpush1.msra.mxu0 0.0
  %423 = vmatprep.subr.mxu0 0.0
  %424 = vmatpush1.msra.mxu0 0.0
  %425 = vmatprep.subr.mxu0 0.0
  %426 = vmatpush1.msra.mxu0 0.0
  %427 = vmatprep.subr.mxu0 0.0
  %428 = vmatpush1.msra.mxu0 0.0
  %429 = vmatprep.subr.mxu0 0.0
  %430 = vmatpush1.msra.mxu0 0.0
  %431 = vmatprep.subr.mxu0 0.0
  %432 = vmatpush1.msra.mxu0 0.0
  %433 = vmatprep.subr.mxu0 0.0
  %434 = vmatpush1.msra.mxu0 0.0
  %435 = vmatprep.subr.mxu0 0.0
  %436 = vmatpush1.msra.mxu0 0.0
  %437 = vmatprep.subr.mxu0 0.0
  %438 = vmatpush1.msra.mxu0 0.0
  %439 = vmatprep.subr.mxu0 0.0
  %440 = vmatpush1.msra.mxu0 0.0
  %441 = vmatprep.subr.mxu0 0.0
  %442 = vmatpush1.msra.mxu0 0.0
  %443 = vmatprep.subr.mxu0 0.0
  %444 = vmatpush1.msra.mxu0 0.0
  %445 = vmatprep.subr.mxu0 0.0
  %446 = vmatpush1.msra.mxu0 0.0
  %447 = vmatprep.subr.mxu0 0.0
  %448 = vmatpush1.msra.mxu0 0.0
  %449 = vmatprep.subr.mxu0 0.0
  %450 = vmatpush1.msra.mxu0 0.0
  %451 = vmatprep.subr.mxu0 0.0
  %452 = vmatpush1.msra.mxu0 0.0
  %453 = vmatprep.subr.mxu0 0.0
  %454 = vmatpush1.msra.mxu0 0.0
  %455 = vmatprep.subr.mxu0 0.0
  %456 = vmatpush1.msra.mxu0 0.0
  %457 = vmatprep.subr.mxu0 0.0
  %458 = vmatpush1.msra.mxu0 0.0
  %459 = vmatprep.subr.mxu0 0.0
  %460 = vmatpush1.msra.mxu0 0.0
  %461 = vmatprep.subr.mxu0 0.0
  %462 = vmatpush1.msra.mxu0 0.0
  %463 = vmatprep.subr.mxu0 0.0
  %464 = vmatpush1.msra.mxu0 0.0
  %465 = vmatprep.subr.mxu0 0.0
  %466 = vmatpush1.msra.mxu0 0.0
  %467 = vmatprep.subr.mxu0 0.0
  %468 = vmatpush1.msra.mxu0 0.0
  %469 = vmatprep.subr.mxu0 0.0
  %470 = vmatpush1.msra.mxu0 0.0
  %471 = vmatprep.mubr.f32.mxu0 0.0
  %472 = vmatmul.mubr.f32.gmra.mrb[0].mxu0 %v405
  %v473 = vpop.f32.mrb[0].mxu0
  %v474 = vadd.f32 0.0, %v473
  %v475 = vpop.f32.mrb[0].mxu0
  %476 = vdwg.mxu0
  %v477 = vadd.f32 %v404, %v474
  %v478 = vxor.u32 %v477, 2147483648
  %v479 = vmul.f32 %v478, 1.442695
  %v480 = vpow.pop %v479
  %v481 = vadd.f32 %v480, 1.0
  %v482 = vrcp.pop %v481
  %v483 = vmul.f32 1.0, %v482
  %v484 = vtanh.pop %v477
  %v485 = vmul.f32 %v483, %v390
  %487 = vrot.lane.b32.xlu0 %v484, 64
  %v488 = vpop.permute.xlu0 %487
  %v490 = vmul.f32 %v483, %v488
  %492 = vrot.lane.b32.xlu0 %v490, 32
  %v493 = vpop.permute.xlu0 %492
  %v495 = vadd.f32 %v485, %v493
  %v496 = vtanh.pop %v495
  %498 = vrot.lane.b32.xlu0 %v496, 64
  %v499 = vpop.permute.xlu0 %498
  %v501 = vmul.f32 %v483, %v499
  %503 = vrot.lane.b32.xlu0 %v501, 32
  %v504 = vpop.permute.xlu0 %503
  %s506 = scalar_lea.vmem [#allocation3], 16
  %507 = vst.msk [vmem:[%s506] sm:$0xff] %vm52, %v504
  %s508 = scalar_lea.vmem [#allocation2], 24
  %v509 = vld [vmem:[%s508] sm:$0xff]
  %v510 = vsel %vm52, %v504, 0
  %512 = vmatprep.subr.mxu0 0.0
  %513 = vmatpush1.msra.mxu0 %v190
  %514 = vmatprep.subr.mxu0 0.0
  %515 = vmatpush1.msra.mxu0 %v191
  %516 = vmatprep.subr.mxu0 0.0
  %517 = vmatpush1.msra.mxu0 %v192
  %518 = vmatprep.subr.mxu0 0.0
  %519 = vmatpush1.msra.mxu0 %v193
  %520 = vmatprep.subr.mxu0 0.0
  %521 = vmatpush1.msra.mxu0 0.0
  %522 = vmatprep.subr.mxu0 0.0
  %523 = vmatpush1.msra.mxu0 0.0
  %524 = vmatprep.subr.mxu0 0.0
  %525 = vmatpush1.msra.mxu0 0.0
  %526 = vmatprep.subr.mxu0 0.0
  %527 = vmatpush1.msra.mxu0 0.0
  %528 = vmatprep.subr.mxu0 0.0
  %529 = vmatpush1.msra.mxu0 0.0
  %530 = vmatprep.subr.mxu0 0.0
  %531 = vmatpush1.msra.mxu0 0.0
  %532 = vmatprep.subr.mxu0 0.0
  %533 = vmatpush1.msra.mxu0 0.0
  %534 = vmatprep.subr.mxu0 0.0
  %535 = vmatpush1.msra.mxu0 0.0
  %536 = vmatprep.subr.mxu0 0.0
  %537 = vmatpush1.msra.mxu0 0.0
  %538 = vmatprep.subr.mxu0 0.0
  %539 = vmatpush1.msra.mxu0 0.0
  %540 = vmatprep.subr.mxu0 0.0
  %541 = vmatpush1.msra.mxu0 0.0
  %542 = vmatprep.subr.mxu0 0.0
  %543 = vmatpush1.msra.mxu0 0.0
  %544 = vmatprep.subr.mxu0 0.0
  %545 = vmatpush1.msra.mxu0 0.0
  %546 = vmatprep.subr.mxu0 0.0
  %547 = vmatpush1.msra.mxu0 0.0
  %548 = vmatprep.subr.mxu0 0.0
  %549 = vmatpush1.msra.mxu0 0.0
  %550 = vmatprep.subr.mxu0 0.0
  %551 = vmatpush1.msra.mxu0 0.0
  %552 = vmatprep.subr.mxu0 0.0
  %553 = vmatpush1.msra.mxu0 0.0
  %554 = vmatprep.subr.mxu0 0.0
  %555 = vmatpush1.msra.mxu0 0.0
  %556 = vmatprep.subr.mxu0 0.0
  %557 = vmatpush1.msra.mxu0 0.0
  %558 = vmatprep.subr.mxu0 0.0
  %559 = vmatpush1.msra.mxu0 0.0
  %560 = vmatprep.subr.mxu0 0.0
  %561 = vmatpush1.msra.mxu0 0.0
  %562 = vmatprep.subr.mxu0 0.0
  %563 = vmatpush1.msra.mxu0 0.0
  %564 = vmatprep.subr.mxu0 0.0
  %565 = vmatpush1.msra.mxu0 0.0
  %566 = vmatprep.subr.mxu0 0.0
  %567 = vmatpush1.msra.mxu0 0.0
  %568 = vmatprep.subr.mxu0 0.0
  %569 = vmatpush1.msra.mxu0 0.0
  %570 = vmatprep.subr.mxu0 0.0
  %571 = vmatpush1.msra.mxu0 0.0
  %572 = vmatprep.subr.mxu0 0.0
  %573 = vmatpush1.msra.mxu0 0.0
  %574 = vmatprep.subr.mxu0 0.0
  %575 = vmatpush1.msra.mxu0 0.0
  %576 = vmatprep.mubr.f32.mxu0 0.0
  %577 = vmatmul.mubr.f32.gmra.mrb[0].mxu0 %v510
  %v578 = vpop.f32.mrb[0].mxu0
  %v579 = vadd.f32 0.0, %v578
  %v580 = vpop.f32.mrb[0].mxu0
  %581 = vdwg.mxu0
  %v582 = vadd.f32 %v509, %v579
  %v583 = vxor.u32 %v582, 2147483648
  %v584 = vmul.f32 %v583, 1.442695
  %v585 = vpow.pop %v584
  %v586 = vadd.f32 %v585, 1.0
  %v587 = vrcp.pop %v586
  %v588 = vmul.f32 1.0, %v587
  %v589 = vtanh.pop %v582
  %v590 = vmul.f32 %v588, %v495
  %592 = vrot.lane.b32.xlu0 %v589, 64
  %v593 = vpop.permute.xlu0 %592
  %v595 = vmul.f32 %v588, %v593
  %597 = vrot.lane.b32.xlu0 %v595, 32
  %v598 = vpop.permute.xlu0 %597
  %v600 = vadd.f32 %v590, %v598
  %v601 = vtanh.pop %v600
  %603 = vrot.lane.b32.xlu0 %v601, 64
  %v604 = vpop.permute.xlu0 %603
  %v606 = vmul.f32 %v588, %v604
  %608 = vrot.lane.b32.xlu0 %v606, 32
  %v609 = vpop.permute.xlu0 %608
  %s611 = scalar_lea.vmem [#allocation3], 24
  %612 = vst.msk [vmem:[%s611] sm:$0xff] %vm52, %v609
  %s613 = scalar_lea.vmem [#allocation2], 32
  %v614 = vld [vmem:[%s613] sm:$0xff]
  %v615 = vsel %vm52, %v609, 0
  %617 = vmatprep.subr.mxu0 0.0
  %618 = vmatpush1.msra.mxu0 %v190
  %619 = vmatprep.subr.mxu0 0.0
  %620 = vmatpush1.msra.mxu0 %v191
  %621 = vmatprep.subr.mxu0 0.0
  %622 = vmatpush1.msra.mxu0 %v192
  %623 = vmatprep.subr.mxu0 0.0
  %624 = vmatpush1.msra.mxu0 %v193
  %625 = vmatprep.subr.mxu0 0.0
  %626 = vmatpush1.msra.mxu0 0.0
  %627 = vmatprep.subr.mxu0 0.0
  %628 = vmatpush1.msra.mxu0 0.0
  %629 = vmatprep.subr.mxu0 0.0
  %630 = vmatpush1.msra.mxu0 0.0
  %631 = vmatprep.subr.mxu0 0.0
  %632 = vmatpush1.msra.mxu0 0.0
  %633 = vmatprep.subr.mxu0 0.0
  %634 = vmatpush1.msra.mxu0 0.0
  %635 = vmatprep.subr.mxu0 0.0
  %636 = vmatpush1.msra.mxu0 0.0
  %637 = vmatprep.subr.mxu0 0.0
  %638 = vmatpush1.msra.mxu0 0.0
  %639 = vmatprep.subr.mxu0 0.0
  %640 = vmatpush1.msra.mxu0 0.0
  %641 = vmatprep.subr.mxu0 0.0
  %642 = vmatpush1.msra.mxu0 0.0
  %643 = vmatprep.subr.mxu0 0.0
  %644 = vmatpush1.msra.mxu0 0.0
  %645 = vmatprep.subr.mxu0 0.0
  %646 = vmatpush1.msra.mxu0 0.0
  %647 = vmatprep.subr.mxu0 0.0
  %648 = vmatpush1.msra.mxu0 0.0
  %649 = vmatprep.subr.mxu0 0.0
  %650 = vmatpush1.msra.mxu0 0.0
  %651 = vmatprep.subr.mxu0 0.0
  %652 = vmatpush1.msra.mxu0 0.0
  %653 = vmatprep.subr.mxu0 0.0
  %654 = vmatpush1.msra.mxu0 0.0
  %655 = vmatprep.subr.mxu0 0.0
  %656 = vmatpush1.msra.mxu0 0.0
  %657 = vmatprep.subr.mxu0 0.0
  %658 = vmatpush1.msra.mxu0 0.0
  %659 = vmatprep.subr.mxu0 0.0
  %660 = vmatpush1.msra.mxu0 0.0
  %661 = vmatprep.subr.mxu0 0.0
  %662 = vmatpush1.msra.mxu0 0.0
  %663 = vmatprep.subr.mxu0 0.0
  %664 = vmatpush1.msra.mxu0 0.0
  %665 = vmatprep.subr.mxu0 0.0
  %666 = vmatpush1.msra.mxu0 0.0
  %667 = vmatprep.subr.mxu0 0.0
  %668 = vmatpush1.msra.mxu0 0.0
  %669 = vmatprep.subr.mxu0 0.0
  %670 = vmatpush1.msra.mxu0 0.0
  %671 = vmatprep.subr.mxu0 0.0
  %672 = vmatpush1.msra.mxu0 0.0
  %673 = vmatprep.subr.mxu0 0.0
  %674 = vmatpush1.msra.mxu0 0.0
  %675 = vmatprep.subr.mxu0 0.0
  %676 = vmatpush1.msra.mxu0 0.0
  %677 = vmatprep.subr.mxu0 0.0
  %678 = vmatpush1.msra.mxu0 0.0
  %679 = vmatprep.subr.mxu0 0.0
  %680 = vmatpush1.msra.mxu0 0.0
  %681 = vmatprep.mubr.f32.mxu0 0.0
  %682 = vmatmul.mubr.f32.gmra.mrb[0].mxu0 %v615
  %v683 = vpop.f32.mrb[0].mxu0
  %v684 = vadd.f32 0.0, %v683
  %v685 = vpop.f32.mrb[0].mxu0
  %686 = vdwg.mxu0
  %v687 = vadd.f32 %v614, %v684
  %v688 = vxor.u32 %v687, 2147483648
  %v689 = vmul.f32 %v688, 1.442695
  %v690 = vpow.pop %v689
  %v691 = vadd.f32 %v690, 1.0
  %v692 = vrcp.pop %v691
  %v693 = vmul.f32 1.0, %v692
  %v694 = vtanh.pop %v687
  %v695 = vmul.f32 %v693, %v600
  %697 = vrot.lane.b32.xlu0 %v694, 64
  %v698 = vpop.permute.xlu0 %697
  %v700 = vmul.f32 %v693, %v698
  %702 = vrot.lane.b32.xlu0 %v700, 32
  %v703 = vpop.permute.xlu0 %702
  %v705 = vadd.f32 %v695, %v703
  %v706 = vtanh.pop %v705
  %708 = vrot.lane.b32.xlu0 %v706, 64
  %v709 = vpop.permute.xlu0 %708
  %v711 = vmul.f32 %v693, %v709
  %713 = vrot.lane.b32.xlu0 %v711, 32
  %v714 = vpop.permute.xlu0 %713
  %s716 = scalar_lea.vmem [#allocation3], 32
  %717 = vst.msk [vmem:[%s716] sm:$0xff] %vm52, %v714
  %s718 = scalar_lea.vmem [#allocation2], 40
  %v719 = vld [vmem:[%s718] sm:$0xff]
  %v720 = vsel %vm52, %v714, 0
  %722 = vmatprep.subr.mxu0 0.0
  %723 = vmatpush1.msra.mxu0 %v190
  %724 = vmatprep.subr.mxu0 0.0
  %725 = vmatpush1.msra.mxu0 %v191
  %726 = vmatprep.subr.mxu0 0.0
  %727 = vmatpush1.msra.mxu0 %v192
  %728 = vmatprep.subr.mxu0 0.0
  %729 = vmatpush1.msra.mxu0 %v193
  %730 = vmatprep.subr.mxu0 0.0
  %731 = vmatpush1.msra.mxu0 0.0
  %732 = vmatprep.subr.mxu0 0.0
  %733 = vmatpush1.msra.mxu0 0.0
  %734 = vmatprep.subr.mxu0 0.0
  %735 = vmatpush1.msra.mxu0 0.0
  %736 = vmatprep.subr.mxu0 0.0
  %737 = vmatpush1.msra.mxu0 0.0
  %738 = vmatprep.subr.mxu0 0.0
  %739 = vmatpush1.msra.mxu0 0.0
  %740 = vmatprep.subr.mxu0 0.0
  %741 = vmatpush1.msra.mxu0 0.0
  %742 = vmatprep.subr.mxu0 0.0
  %743 = vmatpush1.msra.mxu0 0.0
  %744 = vmatprep.subr.mxu0 0.0
  %745 = vmatpush1.msra.mxu0 0.0
  %746 = vmatprep.subr.mxu0 0.0
  %747 = vmatpush1.msra.mxu0 0.0
  %748 = vmatprep.subr.mxu0 0.0
  %749 = vmatpush1.msra.mxu0 0.0
  %750 = vmatprep.subr.mxu0 0.0
  %751 = vmatpush1.msra.mxu0 0.0
  %752 = vmatprep.subr.mxu0 0.0
  %753 = vmatpush1.msra.mxu0 0.0
  %754 = vmatprep.subr.mxu0 0.0
  %755 = vmatpush1.msra.mxu0 0.0
  %756 = vmatprep.subr.mxu0 0.0
  %757 = vmatpush1.msra.mxu0 0.0
  %758 = vmatprep.subr.mxu0 0.0
  %759 = vmatpush1.msra.mxu0 0.0
  %760 = vmatprep.subr.mxu0 0.0
  %761 = vmatpush1.msra.mxu0 0.0
  %762 = vmatprep.subr.mxu0 0.0
  %763 = vmatpush1.msra.mxu0 0.0
  %764 = vmatprep.subr.mxu0 0.0
  %765 = vmatpush1.msra.mxu0 0.0
  %766 = vmatprep.subr.mxu0 0.0
  %767 = vmatpush1.msra.mxu0 0.0
  %768 = vmatprep.subr.mxu0 0.0
  %769 = vmatpush1.msra.mxu0 0.0
  %770 = vmatprep.subr.mxu0 0.0
  %771 = vmatpush1.msra.mxu0 0.0
  %772 = vmatprep.subr.mxu0 0.0
  %773 = vmatpush1.msra.mxu0 0.0
  %774 = vmatprep.subr.mxu0 0.0
  %775 = vmatpush1.msra.mxu0 0.0
  %776 = vmatprep.subr.mxu0 0.0
  %777 = vmatpush1.msra.mxu0 0.0
  %778 = vmatprep.subr.mxu0 0.0
  %779 = vmatpush1.msra.mxu0 0.0
  %780 = vmatprep.subr.mxu0 0.0
  %781 = vmatpush1.msra.mxu0 0.0
  %782 = vmatprep.subr.mxu0 0.0
  %783 = vmatpush1.msra.mxu0 0.0
  %784 = vmatprep.subr.mxu0 0.0
  %785 = vmatpush1.msra.mxu0 0.0
  %786 = vmatprep.mubr.f32.mxu0 0.0
  %787 = vmatmul.mubr.f32.gmra.mrb[0].mxu0 %v720
  %v788 = vpop.f32.mrb[0].mxu0
  %v789 = vadd.f32 0.0, %v788
  %v790 = vpop.f32.mrb[0].mxu0
  %791 = vdwg.mxu0
  %v792 = vadd.f32 %v719, %v789
  %v793 = vxor.u32 %v792, 2147483648
  %v794 = vmul.f32 %v793, 1.442695
  %v795 = vpow.pop %v794
  %v796 = vadd.f32 %v795, 1.0
  %v797 = vrcp.pop %v796
  %v798 = vmul.f32 1.0, %v797
  %v799 = vtanh.pop %v792
  %v800 = vmul.f32 %v798, %v705
  %802 = vrot.lane.b32.xlu0 %v799, 64
  %v803 = vpop.permute.xlu0 %802
  %v805 = vmul.f32 %v798, %v803
  %807 = vrot.lane.b32.xlu0 %v805, 32
  %v808 = vpop.permute.xlu0 %807
  %v810 = vadd.f32 %v800, %v808
  %v811 = vtanh.pop %v810
  %813 = vrot.lane.b32.xlu0 %v811, 64
  %v814 = vpop.permute.xlu0 %813
  %v816 = vmul.f32 %v798, %v814
  %818 = vrot.lane.b32.xlu0 %v816, 32
  %v819 = vpop.permute.xlu0 %818
  %s821 = scalar_lea.vmem [#allocation3], 40
  %822 = vst.msk [vmem:[%s821] sm:$0xff] %vm52, %v819
  %s823 = scalar_lea.vmem [#allocation2], 48
  %v824 = vld [vmem:[%s823] sm:$0xff]
  %v825 = vsel %vm52, %v819, 0
  %827 = vmatprep.subr.mxu0 0.0
  %828 = vmatpush1.msra.mxu0 %v190
  %829 = vmatprep.subr.mxu0 0.0
  %830 = vmatpush1.msra.mxu0 %v191
  %831 = vmatprep.subr.mxu0 0.0
  %832 = vmatpush1.msra.mxu0 %v192
  %833 = vmatprep.subr.mxu0 0.0
  %834 = vmatpush1.msra.mxu0 %v193
  %835 = vmatprep.subr.mxu0 0.0
  %836 = vmatpush1.msra.mxu0 0.0
  %837 = vmatprep.subr.mxu0 0.0
  %838 = vmatpush1.msra.mxu0 0.0
  %839 = vmatprep.subr.mxu0 0.0
  %840 = vmatpush1.msra.mxu0 0.0
  %841 = vmatprep.subr.mxu0 0.0
  %842 = vmatpush1.msra.mxu0 0.0
  %843 = vmatprep.subr.mxu0 0.0
  %844 = vmatpush1.msra.mxu0 0.0
  %845 = vmatprep.subr.mxu0 0.0
  %846 = vmatpush1.msra.mxu0 0.0
  %847 = vmatprep.subr.mxu0 0.0
  %848 = vmatpush1.msra.mxu0 0.0
  %849 = vmatprep.subr.mxu0 0.0
  %850 = vmatpush1.msra.mxu0 0.0
  %851 = vmatprep.subr.mxu0 0.0
  %852 = vmatpush1.msra.mxu0 0.0
  %853 = vmatprep.subr.mxu0 0.0
  %854 = vmatpush1.msra.mxu0 0.0
  %855 = vmatprep.subr.mxu0 0.0
  %856 = vmatpush1.msra.mxu0 0.0
  %857 = vmatprep.subr.mxu0 0.0
  %858 = vmatpush1.msra.mxu0 0.0
  %859 = vmatprep.subr.mxu0 0.0
  %860 = vmatpush1.msra.mxu0 0.0
  %861 = vmatprep.subr.mxu0 0.0
  %862 = vmatpush1.msra.mxu0 0.0
  %863 = vmatprep.subr.mxu0 0.0
  %864 = vmatpush1.msra.mxu0 0.0
  %865 = vmatprep.subr.mxu0 0.0
  %866 = vmatpush1.msra.mxu0 0.0
  %867 = vmatprep.subr.mxu0 0.0
  %868 = vmatpush1.msra.mxu0 0.0
  %869 = vmatprep.subr.mxu0 0.0
  %870 = vmatpush1.msra.mxu0 0.0
  %871 = vmatprep.subr.mxu0 0.0
  %872 = vmatpush1.msra.mxu0 0.0
  %873 = vmatprep.subr.mxu0 0.0
  %874 = vmatpush1.msra.mxu0 0.0
  %875 = vmatprep.subr.mxu0 0.0
  %876 = vmatpush1.msra.mxu0 0.0
  %877 = vmatprep.subr.mxu0 0.0
  %878 = vmatpush1.msra.mxu0 0.0
  %879 = vmatprep.subr.mxu0 0.0
  %880 = vmatpush1.msra.mxu0 0.0
  %881 = vmatprep.subr.mxu0 0.0
  %882 = vmatpush1.msra.mxu0 0.0
  %883 = vmatprep.subr.mxu0 0.0
  %884 = vmatpush1.msra.mxu0 0.0
  %885 = vmatprep.subr.mxu0 0.0
  %886 = vmatpush1.msra.mxu0 0.0
  %887 = vmatprep.subr.mxu0 0.0
  %888 = vmatpush1.msra.mxu0 0.0
  %889 = vmatprep.subr.mxu0 0.0
  %890 = vmatpush1.msra.mxu0 0.0
  %891 = vmatprep.mubr.f32.mxu0 0.0
  %892 = vmatmul.mubr.f32.gmra.mrb[0].mxu0 %v825
  %v893 = vpop.f32.mrb[0].mxu0
  %v894 = vadd.f32 0.0, %v893
  %v895 = vpop.f32.mrb[0].mxu0
  %896 = vdwg.mxu0
  %v897 = vadd.f32 %v824, %v894
  %v898 = vxor.u32 %v897, 2147483648
  %v899 = vmul.f32 %v898, 1.442695
  %v900 = vpow.pop %v899
  %v901 = vadd.f32 %v900, 1.0
  %v902 = vrcp.pop %v901
  %v903 = vmul.f32 1.0, %v902
  %v904 = vtanh.pop %v897
  %v905 = vmul.f32 %v903, %v810
  %907 = vrot.lane.b32.xlu0 %v904, 64
  %v908 = vpop.permute.xlu0 %907
  %v910 = vmul.f32 %v903, %v908
  %912 = vrot.lane.b32.xlu0 %v910, 32
  %v913 = vpop.permute.xlu0 %912
  %v915 = vadd.f32 %v905, %v913
  %v916 = vtanh.pop %v915
  %918 = vrot.lane.b32.xlu0 %v916, 64
  %v919 = vpop.permute.xlu0 %918
  %v921 = vmul.f32 %v903, %v919
  %923 = vrot.lane.b32.xlu0 %v921, 32
  %v924 = vpop.permute.xlu0 %923
  %s926 = scalar_lea.vmem [#allocation3], 48
  %927 = vst.msk [vmem:[%s926] sm:$0xff] %vm52, %v924
  %s928 = scalar_lea.vmem [#allocation2], 56
  %v929 = vld [vmem:[%s928] sm:$0xff]
  %v930 = vsel %vm52, %v924, 0
  %932 = vmatprep.subr.mxu0 0.0
  %933 = vmatpush1.msra.mxu0 %v190
  %934 = vmatprep.subr.mxu0 0.0
  %935 = vmatpush1.msra.mxu0 %v191
  %936 = vmatprep.subr.mxu0 0.0
  %937 = vmatpush1.msra.mxu0 %v192
  %938 = vmatprep.subr.mxu0 0.0
  %939 = vmatpush1.msra.mxu0 %v193
  %940 = vmatprep.subr.mxu0 0.0
  %941 = vmatpush1.msra.mxu0 0.0
  %942 = vmatprep.subr.mxu0 0.0
  %943 = vmatpush1.msra.mxu0 0.0
  %944 = vmatprep.subr.mxu0 0.0
  %945 = vmatpush1.msra.mxu0 0.0
  %946 = vmatprep.subr.mxu0 0.0
  %947 = vmatpush1.msra.mxu0 0.0
  %948 = vmatprep.subr.mxu0 0.0
  %949 = vmatpush1.msra.mxu0 0.0
  %950 = vmatprep.subr.mxu0 0.0
  %951 = vmatpush1.msra.mxu0 0.0
  %952 = vmatprep.subr.mxu0 0.0
  %953 = vmatpush1.msra.mxu0 0.0
  %954 = vmatprep.subr.mxu0 0.0
  %955 = vmatpush1.msra.mxu0 0.0
  %956 = vmatprep.subr.mxu0 0.0
  %957 = vmatpush1.msra.mxu0 0.0
  %958 = vmatprep.subr.mxu0 0.0
  %959 = vmatpush1.msra.mxu0 0.0
  %960 = vmatprep.subr.mxu0 0.0
  %961 = vmatpush1.msra.mxu0 0.0
  %962 = vmatprep.subr.mxu0 0.0
  %963 = vmatpush1.msra.mxu0 0.0
  %964 = vmatprep.subr.mxu0 0.0
  %965 = vmatpush1.msra.mxu0 0.0
  %966 = vmatprep.subr.mxu0 0.0
  %967 = vmatpush1.msra.mxu0 0.0
  %968 = vmatprep.subr.mxu0 0.0
  %969 = vmatpush1.msra.mxu0 0.0
  %970 = vmatprep.subr.mxu0 0.0
  %971 = vmatpush1.msra.mxu0 0.0
  %972 = vmatprep.subr.mxu0 0.0
  %973 = vmatpush1.msra.mxu0 0.0
  %974 = vmatprep.subr.mxu0 0.0
  %975 = vmatpush1.msra.mxu0 0.0
  %976 = vmatprep.subr.mxu0 0.0
  %977 = vmatpush1.msra.mxu0 0.0
  %978 = vmatprep.subr.mxu0 0.0
  %979 = vmatpush1.msra.mxu0 0.0
  %980 = vmatprep.subr.mxu0 0.0
  %981 = vmatpush1.msra.mxu0 0.0
  %982 = vmatprep.subr.mxu0 0.0
  %983 = vmatpush1.msra.mxu0 0.0
  %984 = vmatprep.subr.mxu0 0.0
  %985 = vmatpush1.msra.mxu0 0.0
  %986 = vmatprep.subr.mxu0 0.0
  %987 = vmatpush1.msra.mxu0 0.0
  %988 = vmatprep.subr.mxu0 0.0
  %989 = vmatpush1.msra.mxu0 0.0
  %990 = vmatprep.subr.mxu0 0.0
  %991 = vmatpush1.msra.mxu0 0.0
  %992 = vmatprep.subr.mxu0 0.0
  %993 = vmatpush1.msra.mxu0 0.0
  %994 = vmatprep.subr.mxu0 0.0
  %995 = vmatpush1.msra.mxu0 0.0
  %996 = vmatprep.mubr.f32.mxu0 0.0
  %997 = vmatmul.mubr.f32.gmra.mrb[0].mxu0 %v930
  %v998 = vpop.f32.mrb[0].mxu0
  %v999 = vadd.f32 0.0, %v998
  %v1000 = vpop.f32.mrb[0].mxu0
  %1001 = vdwg.mxu0
  %v1002 = vadd.f32 %v929, %v999
  %v1003 = vxor.u32 %v1002, 2147483648
  %v1004 = vmul.f32 %v1003, 1.442695
  %v1005 = vpow.pop %v1004
  %v1006 = vadd.f32 %v1005, 1.0
  %v1007 = vrcp.pop %v1006
  %v1008 = vmul.f32 1.0, %v1007
  %v1009 = vtanh.pop %v1002
  %v1010 = vmul.f32 %v1008, %v915
  %1012 = vrot.lane.b32.xlu0 %v1009, 64
  %v1013 = vpop.permute.xlu0 %1012
  %v1015 = vmul.f32 %v1008, %v1013
  %1017 = vrot.lane.b32.xlu0 %v1015, 32
  %v1018 = vpop.permute.xlu0 %1017
  %v1020 = vadd.f32 %v1010, %v1018
  %v1021 = vtanh.pop %v1020
  %1023 = vrot.lane.b32.xlu0 %v1021, 64
  %v1024 = vpop.permute.xlu0 %1023
  %v1026 = vmul.f32 %v1008, %v1024
  %1028 = vrot.lane.b32.xlu0 %v1026, 32
  %v1029 = vpop.permute.xlu0 %1028
  %s1031 = scalar_lea.vmem [#allocation3], 56
  %1032 = vst.msk [vmem:[%s1031] sm:$0xff] %vm52, %v1029
  %v1033 = vld [vmem:[#allocation3] sm:$0xff]
  %v1034 = vld [vmem:[#allocation3 + $0x8] sm:$0xff]
  %v1035 = vld [vmem:[#allocation3 + $0x10] sm:$0xff]
  %v1036 = vld [vmem:[#allocation3 + $0x18] sm:$0xff]
  %v1037 = vld [vmem:[#allocation3 + $0x20] sm:$0xff]
  %v1038 = vld [vmem:[#allocation3 + $0x28] sm:$0xff]
  %v1039 = vld [vmem:[#allocation3 + $0x30] sm:$0xff]
  %v1040 = vld [vmem:[#allocation3 + $0x38] sm:$0xff]
  %s1041 = scalar_lea.vmem %s1, 32
  %v1042 = vld [vmem:[%s1041] sm:$0xff]
  %v1043 = vld [vmem:[%s1041 + $0x8] sm:$0xff]
  %v1044 = vld [vmem:[%s1041 + $0x10] sm:$0xff]
  %v1045 = vld [vmem:[%s1041 + $0x18] sm:$0xff]
  %s1046 = scalar_lea.vmem %s3, 1
  %v1047 = vld [vmem:[%s1046] sm:$0x1]
  %v1049 = vlaneseq
  %v1050 = vshrl.u32 %v1049, 7
  %v1051 = vsub.s32 0, %v1050
  %v1052 = vrot.slane %v1047, %v1051
  %v1055 = vsel %vm52, %v1033, 0
  %v1058 = vsel %vm52, %v1034, 0
  %v1061 = vsel %vm52, %v1035, 0
  %v1064 = vsel %vm52, %v1036, 0
  %v1067 = vsel %vm52, %v1037, 0
  %v1070 = vsel %vm52, %v1038, 0
  %v1073 = vsel %vm52, %v1039, 0
  %v1076 = vsel %vm52, %v1040, 0
  %1078 = vmatprep.subr.mxu0 0.0
  %1079 = vmatpush1.msra.mxu0 %v1042
  %1080 = vmatprep.subr.mxu0 0.0
  %1081 = vmatpush1.msra.mxu0 %v1043
  %1082 = vmatprep.subr.mxu0 0.0
  %1083 = vmatpush1.msra.mxu0 %v1044
  %1084 = vmatprep.subr.mxu0 0.0
  %1085 = vmatpush1.msra.mxu0 %v1045
  %1086 = vmatprep.subr.mxu0 0.0
  %1087 = vmatpush1.msra.mxu0 0.0
  %1088 = vmatprep.subr.mxu0 0.0
  %1089 = vmatpush1.msra.mxu0 0.0
  %1090 = vmatprep.subr.mxu0 0.0
  %1091 = vmatpush1.msra.mxu0 0.0
  %1092 = vmatprep.subr.mxu0 0.0
  %1093 = vmatpush1.msra.mxu0 0.0
  %1094 = vmatprep.subr.mxu0 0.0
  %1095 = vmatpush1.msra.mxu0 0.0
  %1096 = vmatprep.subr.mxu0 0.0
  %1097 = vmatpush1.msra.mxu0 0.0
  %1098 = vmatprep.subr.mxu0 0.0
  %1099 = vmatpush1.msra.mxu0 0.0
  %1100 = vmatprep.subr.mxu0 0.0
  %1101 = vmatpush1.msra.mxu0 0.0
  %1102 = vmatprep.subr.mxu0 0.0
  %1103 = vmatpush1.msra.mxu0 0.0
  %1104 = vmatprep.subr.mxu0 0.0
  %1105 = vmatpush1.msra.mxu0 0.0
  %1106 = vmatprep.subr.mxu0 0.0
  %1107 = vmatpush1.msra.mxu0 0.0
  %1108 = vmatprep.subr.mxu0 0.0
  %1109 = vmatpush1.msra.mxu0 0.0
  %1110 = vmatprep.subr.mxu0 0.0
  %1111 = vmatpush1.msra.mxu0 0.0
  %1112 = vmatprep.subr.mxu0 0.0
  %1113 = vmatpush1.msra.mxu0 0.0
  %1114 = vmatprep.subr.mxu0 0.0
  %1115 = vmatpush1.msra.mxu0 0.0
  %1116 = vmatprep.subr.mxu0 0.0
  %1117 = vmatpush1.msra.mxu0 0.0
  %1118 = vmatprep.subr.mxu0 0.0
  %1119 = vmatpush1.msra.mxu0 0.0
  %1120 = vmatprep.subr.mxu0 0.0
  %1121 = vmatpush1.msra.mxu0 0.0
  %1122 = vmatprep.subr.mxu0 0.0
  %1123 = vmatpush1.msra.mxu0 0.0
  %1124 = vmatprep.subr.mxu0 0.0
  %1125 = vmatpush1.msra.mxu0 0.0
  %1126 = vmatprep.subr.mxu0 0.0
  %1127 = vmatpush1.msra.mxu0 0.0
  %1128 = vmatprep.subr.mxu0 0.0
  %1129 = vmatpush1.msra.mxu0 0.0
  %1130 = vmatprep.subr.mxu0 0.0
  %1131 = vmatpush1.msra.mxu0 0.0
  %1132 = vmatprep.subr.mxu0 0.0
  %1133 = vmatpush1.msra.mxu0 0.0
  %1134 = vmatprep.subr.mxu0 0.0
  %1135 = vmatpush1.msra.mxu0 0.0
  %1136 = vmatprep.subr.mxu0 0.0
  %1137 = vmatpush1.msra.mxu0 0.0
  %1138 = vmatprep.subr.mxu0 0.0
  %1139 = vmatpush1.msra.mxu0 0.0
  %1140 = vmatprep.subr.mxu0 0.0
  %1141 = vmatpush1.msra.mxu0 0.0
  %1142 = vmatprep.mubr.f32.mxu0 0.0
  %1143 = vmatmul.mubr.f32.gmra.mrb[0].mxu0 %v1055
  %v1144 = vpop.f32.mrb[0].mxu0
  %v1145 = vadd.f32 %v1052, %v1144
  %v1146 = vpop.f32.mrb[0].mxu0
  %1147 = vmatprep.mubr.f32.mxu0 0.0
  %1148 = vmatmul.mubr.f32.gmra.mrb[0].mxu0 %v1058
  %v1149 = vpop.f32.mrb[0].mxu0
  %v1150 = vadd.f32 %v1052, %v1149
  %v1151 = vpop.f32.mrb[0].mxu0
  %1152 = vmatprep.mubr.f32.mxu0 0.0
  %1153 = vmatmul.mubr.f32.gmra.mrb[0].mxu0 %v1061
  %v1154 = vpop.f32.mrb[0].mxu0
  %v1155 = vadd.f32 %v1052, %v1154
  %v1156 = vpop.f32.mrb[0].mxu0
  %1157 = vmatprep.mubr.f32.mxu0 0.0
  %1158 = vmatmul.mubr.f32.gmra.mrb[0].mxu0 %v1064
  %v1159 = vpop.f32.mrb[0].mxu0
  %v1160 = vadd.f32 %v1052, %v1159
  %v1161 = vpop.f32.mrb[0].mxu0
  %1162 = vmatprep.mubr.f32.mxu0 0.0
  %1163 = vmatmul.mubr.f32.gmra.mrb[0].mxu0 %v1067
  %v1164 = vpop.f32.mrb[0].mxu0
  %v1165 = vadd.f32 %v1052, %v1164
  %v1166 = vpop.f32.mrb[0].mxu0
  %1167 = vmatprep.mubr.f32.mxu0 0.0
  %1168 = vmatmul.mubr.f32.gmra.mrb[0].mxu0 %v1070
  %v1169 = vpop.f32.mrb[0].mxu0
  %v1170 = vadd.f32 %v1052, %v1169
  %v1171 = vpop.f32.mrb[0].mxu0
  %1172 = vmatprep.mubr.f32.mxu0 0.0
  %1173 = vmatmul.mubr.f32.gmra.mrb[0].mxu0 %v1073
  %v1174 = vpop.f32.mrb[0].mxu0
  %v1175 = vadd.f32 %v1052, %v1174
  %v1176 = vpop.f32.mrb[0].mxu0
  %1177 = vmatprep.mubr.f32.mxu0 0.0
  %1178 = vmatmul.mubr.f32.gmra.mrb[0].mxu0 %v1076
  %v1179 = vpop.f32.mrb[0].mxu0
  %v1180 = vadd.f32 %v1052, %v1179
  %v1181 = vpop.f32.mrb[0].mxu0
  %1182 = vdwg.mxu0
  %1183 = vst [vmem:[#allocation2] sm:$0xff] %v1145
  %1184 = vst [vmem:[#allocation2 + $0x8] sm:$0xff] %v1150
  %1185 = vst [vmem:[#allocation2 + $0x10] sm:$0xff] %v1155
  %1186 = vst [vmem:[#allocation2 + $0x18] sm:$0xff] %v1160
  %1187 = vst [vmem:[#allocation2 + $0x20] sm:$0xff] %v1165
  %1188 = vst [vmem:[#allocation2 + $0x28] sm:$0xff] %v1170
  %1189 = vst [vmem:[#allocation2 + $0x30] sm:$0xff] %v1175
  %1190 = vst [vmem:[#allocation2 + $0x38] sm:$0xff] %v1180
  %s1191 = scalar_lea.vmem %s2, 32
  %v1192 = vld [vmem:[%s1191] sm:$0xff]
  %v1193 = vld [vmem:[%s1191 + $0x8] sm:$0xff]
  %v1194 = vld [vmem:[%s1191 + $0x10] sm:$0xff]
  %v1195 = vld [vmem:[%s1191 + $0x18] sm:$0xff]
  %v1196 = vld [vmem:[#allocation2] sm:$0xff]
  %1197 = vmatprep.subr.mxu0 0.0
  %1198 = vmatpush1.msra.mxu0 %v1192
  %1199 = vmatprep.subr.mxu0 0.0
  %1200 = vmatpush1.msra.mxu0 %v1193
  %1201 = vmatprep.subr.mxu0 0.0
  %1202 = vmatpush1.msra.mxu0 %v1194
  %1203 = vmatprep.subr.mxu0 0.0
  %1204 = vmatpush1.msra.mxu0 %v1195
  %1205 = vmatprep.subr.mxu0 0.0
  %1206 = vmatpush1.msra.mxu0 0.0
  %1207 = vmatprep.subr.mxu0 0.0
  %1208 = vmatpush1.msra.mxu0 0.0
  %1209 = vmatprep.subr.mxu0 0.0
  %1210 = vmatpush1.msra.mxu0 0.0
  %1211 = vmatprep.subr.mxu0 0.0
  %1212 = vmatpush1.msra.mxu0 0.0
  %1213 = vmatprep.subr.mxu0 0.0
  %1214 = vmatpush1.msra.mxu0 0.0
  %1215 = vmatprep.subr.mxu0 0.0
  %1216 = vmatpush1.msra.mxu0 0.0
  %1217 = vmatprep.subr.mxu0 0.0
  %1218 = vmatpush1.msra.mxu0 0.0
  %1219 = vmatprep.subr.mxu0 0.0
  %1220 = vmatpush1.msra.mxu0 0.0
  %1221 = vmatprep.subr.mxu0 0.0
  %1222 = vmatpush1.msra.mxu0 0.0
  %1223 = vmatprep.subr.mxu0 0.0
  %1224 = vmatpush1.msra.mxu0 0.0
  %1225 = vmatprep.subr.mxu0 0.0
  %1226 = vmatpush1.msra.mxu0 0.0
  %1227 = vmatprep.subr.mxu0 0.0
  %1228 = vmatpush1.msra.mxu0 0.0
  %1229 = vmatprep.subr.mxu0 0.0
  %1230 = vmatpush1.msra.mxu0 0.0
  %1231 = vmatprep.subr.mxu0 0.0
  %1232 = vmatpush1.msra.mxu0 0.0
  %1233 = vmatprep.subr.mxu0 0.0
  %1234 = vmatpush1.msra.mxu0 0.0
  %1235 = vmatprep.subr.mxu0 0.0
  %1236 = vmatpush1.msra.mxu0 0.0
  %1237 = vmatprep.subr.mxu0 0.0
  %1238 = vmatpush1.msra.mxu0 0.0
  %1239 = vmatprep.subr.mxu0 0.0
  %1240 = vmatpush1.msra.mxu0 0.0
  %1241 = vmatprep.subr.mxu0 0.0
  %1242 = vmatpush1.msra.mxu0 0.0
  %1243 = vmatprep.subr.mxu0 0.0
  %1244 = vmatpush1.msra.mxu0 0.0
  %1245 = vmatprep.subr.mxu0 0.0
  %1246 = vmatpush1.msra.mxu0 0.0
  %1247 = vmatprep.subr.mxu0 0.0
  %1248 = vmatpush1.msra.mxu0 0.0
  %1249 = vmatprep.subr.mxu0 0.0
  %1250 = vmatpush1.msra.mxu0 0.0
  %1251 = vmatprep.subr.mxu0 0.0
  %1252 = vmatpush1.msra.mxu0 0.0
  %1253 = vmatprep.subr.mxu0 0.0
  %1254 = vmatpush1.msra.mxu0 0.0
  %1255 = vmatprep.subr.mxu0 0.0
  %1256 = vmatpush1.msra.mxu0 0.0
  %1257 = vmatprep.subr.mxu0 0.0
  %1258 = vmatpush1.msra.mxu0 0.0
  %1259 = vmatprep.subr.mxu0 0.0
  %1260 = vmatpush1.msra.mxu0 0.0
  %1261 = vmatprep.mubr.f32.mxu0 0.0
  %1262 = vmatmul.mubr.f32.gmra.mrb[0].mxu0 %v196
  %v1263 = vpop.f32.mrb[0].mxu0
  %v1264 = vadd.f32 0.0, %v1263
  %v1265 = vpop.f32.mrb[0].mxu0
  %1266 = vdwg.mxu0
  %v1267 = vadd.f32 %v1196, %v1264
  %v1268 = vxor.u32 %v1267, 2147483648
  %v1269 = vmul.f32 %v1268, 1.442695
  %v1270 = vpow.pop %v1269
  %v1271 = vadd.f32 %v1270, 1.0
  %v1272 = vrcp.pop %v1271
  %v1273 = vmul.f32 1.0, %v1272
  %v1274 = vtanh.pop %v1267
  %v1275 = vmul.f32 %v1273, 0.0
  %1277 = vrot.lane.b32.xlu0 %v1274, 64
  %v1278 = vpop.permute.xlu0 %1277
  %v1280 = vmul.f32 %v1273, %v1278
  %1282 = vrot.lane.b32.xlu0 %v1280, 32
  %v1283 = vpop.permute.xlu0 %1282
  %v1285 = vadd.f32 %v1275, %v1283
  %v1286 = vtanh.pop %v1285
  %1288 = vrot.lane.b32.xlu0 %v1286, 64
  %v1289 = vpop.permute.xlu0 %1288
  %v1291 = vmul.f32 %v1273, %v1289
  %vm1292 = vcmp.eq.s32.totalorder %v32, 1
  %v1293 = vsel %vm1292, 1, 0
  %1294 = vset.pattern.permute.xlu0 0
  %1295 = vperm.xlu0 %1294, %v1293
  %v1296 = vpop.permute.xlu0 %1295
  %vm1297 = vcmp.eq.s32.totalorder %v1296, 1
  %v1298 = vsel %vm1297, %v1291, 0.0
  %v1299 = vld [vmem:[%s298] sm:$0xff]
  %1301 = vrot.lane.b32.xlu0 %v1291, 32
  %v1302 = vpop.permute.xlu0 %1301
  %v1303 = vsel %vm52, %v1302, 0
  %1305 = vmatprep.subr.mxu0 0.0
  %1306 = vmatpush1.msra.mxu0 %v1192
  %1307 = vmatprep.subr.mxu0 0.0
  %1308 = vmatpush1.msra.mxu0 %v1193
  %1309 = vmatprep.subr.mxu0 0.0
  %1310 = vmatpush1.msra.mxu0 %v1194
  %1311 = vmatprep.subr.mxu0 0.0
  %1312 = vmatpush1.msra.mxu0 %v1195
  %1313 = vmatprep.subr.mxu0 0.0
  %1314 = vmatpush1.msra.mxu0 0.0
  %1315 = vmatprep.subr.mxu0 0.0
  %1316 = vmatpush1.msra.mxu0 0.0
  %1317 = vmatprep.subr.mxu0 0.0
  %1318 = vmatpush1.msra.mxu0 0.0
  %1319 = vmatprep.subr.mxu0 0.0
  %1320 = vmatpush1.msra.mxu0 0.0
  %1321 = vmatprep.subr.mxu0 0.0
  %1322 = vmatpush1.msra.mxu0 0.0
  %1323 = vmatprep.subr.mxu0 0.0
  %1324 = vmatpush1.msra.mxu0 0.0
  %1325 = vmatprep.subr.mxu0 0.0
  %1326 = vmatpush1.msra.mxu0 0.0
  %1327 = vmatprep.subr.mxu0 0.0
  %1328 = vmatpush1.msra.mxu0 0.0
  %1329 = vmatprep.subr.mxu0 0.0
  %1330 = vmatpush1.msra.mxu0 0.0
  %1331 = vmatprep.subr.mxu0 0.0
  %1332 = vmatpush1.msra.mxu0 0.0
  %1333 = vmatprep.subr.mxu0 0.0
  %1334 = vmatpush1.msra.mxu0 0.0
  %1335 = vmatprep.subr.mxu0 0.0
  %1336 = vmatpush1.msra.mxu0 0.0
  %1337 = vmatprep.subr.mxu0 0.0
  %1338 = vmatpush1.msra.mxu0 0.0
  %1339 = vmatprep.subr.mxu0 0.0
  %1340 = vmatpush1.msra.mxu0 0.0
  %1341 = vmatprep.subr.mxu0 0.0
  %1342 = vmatpush1.msra.mxu0 0.0
  %1343 = vmatprep.subr.mxu0 0.0
  %1344 = vmatpush1.msra.mxu0 0.0
  %1345 = vmatprep.subr.mxu0 0.0
  %1346 = vmatpush1.msra.mxu0 0.0
  %1347 = vmatprep.subr.mxu0 0.0
  %1348 = vmatpush1.msra.mxu0 0.0
  %1349 = vmatprep.subr.mxu0 0.0
  %1350 = vmatpush1.msra.mxu0 0.0
  %1351 = vmatprep.subr.mxu0 0.0
  %1352 = vmatpush1.msra.mxu0 0.0
  %1353 = vmatprep.subr.mxu0 0.0
  %1354 = vmatpush1.msra.mxu0 0.0
  %1355 = vmatprep.subr.mxu0 0.0
  %1356 = vmatpush1.msra.mxu0 0.0
  %1357 = vmatprep.subr.mxu0 0.0
  %1358 = vmatpush1.msra.mxu0 0.0
  %1359 = vmatprep.subr.mxu0 0.0
  %1360 = vmatpush1.msra.mxu0 0.0
  %1361 = vmatprep.subr.mxu0 0.0
  %1362 = vmatpush1.msra.mxu0 0.0
  %1363 = vmatprep.subr.mxu0 0.0
  %1364 = vmatpush1.msra.mxu0 0.0
  %1365 = vmatprep.subr.mxu0 0.0
  %1366 = vmatpush1.msra.mxu0 0.0
  %1367 = vmatprep.subr.mxu0 0.0
  %1368 = vmatpush1.msra.mxu0 0.0
  %1369 = vmatprep.mubr.f32.mxu0 0.0
  %1370 = vmatmul.mubr.f32.gmra.mrb[0].mxu0 %v1303
  %v1371 = vpop.f32.mrb[0].mxu0
  %v1372 = vadd.f32 0.0, %v1371
  %v1373 = vpop.f32.mrb[0].mxu0
  %1374 = vdwg.mxu0
  %v1375 = vadd.f32 %v1299, %v1372
  %v1376 = vxor.u32 %v1375, 2147483648
  %v1377 = vmul.f32 %v1376, 1.442695
  %v1378 = vpow.pop %v1377
  %v1379 = vadd.f32 %v1378, 1.0
  %v1380 = vrcp.pop %v1379
  %v1381 = vmul.f32 1.0, %v1380
  %v1382 = vtanh.pop %v1375
  %v1383 = vmul.f32 %v1381, %v1285
  %1385 = vrot.lane.b32.xlu0 %v1382, 64
  %v1386 = vpop.permute.xlu0 %1385
  %v1388 = vmul.f32 %v1381, %v1386
  %1390 = vrot.lane.b32.xlu0 %v1388, 32
  %v1391 = vpop.permute.xlu0 %1390
  %v1393 = vadd.f32 %v1383, %v1391
  %v1394 = vtanh.pop %v1393
  %1396 = vrot.lane.b32.xlu0 %v1394, 64
  %v1397 = vpop.permute.xlu0 %1396
  %v1399 = vmul.f32 %v1381, %v1397
  %vm1400 = vcmp.eq.s32.totalorder %v32, 2
  %v1401 = vsel %vm1400, 1, 0
  %1402 = vset.pattern.permute.xlu0 0
  %1403 = vperm.xlu0 %1402, %v1401
  %v1404 = vpop.permute.xlu0 %1403
  %vm1405 = vcmp.eq.s32.totalorder %v1404, 1
  %v1406 = vsel %vm1405, %v1399, %v1298
  %v1407 = vld [vmem:[%s403] sm:$0xff]
  %1409 = vrot.lane.b32.xlu0 %v1399, 32
  %v1410 = vpop.permute.xlu0 %1409
  %v1411 = vsel %vm52, %v1410, 0
  %1413 = vmatprep.subr.mxu0 0.0
  %1414 = vmatpush1.msra.mxu0 %v1192
  %1415 = vmatprep.subr.mxu0 0.0
  %1416 = vmatpush1.msra.mxu0 %v1193
  %1417 = vmatprep.subr.mxu0 0.0
  %1418 = vmatpush1.msra.mxu0 %v1194
  %1419 = vmatprep.subr.mxu0 0.0
  %1420 = vmatpush1.msra.mxu0 %v1195
  %1421 = vmatprep.subr.mxu0 0.0
  %1422 = vmatpush1.msra.mxu0 0.0
  %1423 = vmatprep.subr.mxu0 0.0
  %1424 = vmatpush1.msra.mxu0 0.0
  %1425 = vmatprep.subr.mxu0 0.0
  %1426 = vmatpush1.msra.mxu0 0.0
  %1427 = vmatprep.subr.mxu0 0.0
  %1428 = vmatpush1.msra.mxu0 0.0
  %1429 = vmatprep.subr.mxu0 0.0
  %1430 = vmatpush1.msra.mxu0 0.0
  %1431 = vmatprep.subr.mxu0 0.0
  %1432 = vmatpush1.msra.mxu0 0.0
  %1433 = vmatprep.subr.mxu0 0.0
  %1434 = vmatpush1.msra.mxu0 0.0
  %1435 = vmatprep.subr.mxu0 0.0
  %1436 = vmatpush1.msra.mxu0 0.0
  %1437 = vmatprep.subr.mxu0 0.0
  %1438 = vmatpush1.msra.mxu0 0.0
  %1439 = vmatprep.subr.mxu0 0.0
  %1440 = vmatpush1.msra.mxu0 0.0
  %1441 = vmatprep.subr.mxu0 0.0
  %1442 = vmatpush1.msra.mxu0 0.0
  %1443 = vmatprep.subr.mxu0 0.0
  %1444 = vmatpush1.msra.mxu0 0.0
  %1445 = vmatprep.subr.mxu0 0.0
  %1446 = vmatpush1.msra.mxu0 0.0
  %1447 = vmatprep.subr.mxu0 0.0
  %1448 = vmatpush1.msra.mxu0 0.0
  %1449 = vmatprep.subr.mxu0 0.0
  %1450 = vmatpush1.msra.mxu0 0.0
  %1451 = vmatprep.subr.mxu0 0.0
  %1452 = vmatpush1.msra.mxu0 0.0
  %1453 = vmatprep.subr.mxu0 0.0
  %1454 = vmatpush1.msra.mxu0 0.0
  %1455 = vmatprep.subr.mxu0 0.0
  %1456 = vmatpush1.msra.mxu0 0.0
  %1457 = vmatprep.subr.mxu0 0.0
  %1458 = vmatpush1.msra.mxu0 0.0
  %1459 = vmatprep.subr.mxu0 0.0
  %1460 = vmatpush1.msra.mxu0 0.0
  %1461 = vmatprep.subr.mxu0 0.0
  %1462 = vmatpush1.msra.mxu0 0.0
  %1463 = vmatprep.subr.mxu0 0.0
  %1464 = vmatpush1.msra.mxu0 0.0
  %1465 = vmatprep.subr.mxu0 0.0
  %1466 = vmatpush1.msra.mxu0 0.0
  %1467 = vmatprep.subr.mxu0 0.0
  %1468 = vmatpush1.msra.mxu0 0.0
  %1469 = vmatprep.subr.mxu0 0.0
  %1470 = vmatpush1.msra.mxu0 0.0
  %1471 = vmatprep.subr.mxu0 0.0
  %1472 = vmatpush1.msra.mxu0 0.0
  %1473 = vmatprep.subr.mxu0 0.0
  %1474 = vmatpush1.msra.mxu0 0.0
  %1475 = vmatprep.subr.mxu0 0.0
  %1476 = vmatpush1.msra.mxu0 0.0
  %1477 = vmatprep.mubr.f32.mxu0 0.0
  %1478 = vmatmul.mubr.f32.gmra.mrb[0].mxu0 %v1411
  %v1479 = vpop.f32.mrb[0].mxu0
  %v1480 = vadd.f32 0.0, %v1479
  %v1481 = vpop.f32.mrb[0].mxu0
  %1482 = vdwg.mxu0
  %v1483 = vadd.f32 %v1407, %v1480
  %v1484 = vxor.u32 %v1483, 2147483648
  %v1485 = vmul.f32 %v1484, 1.442695
  %v1486 = vpow.pop %v1485
  %v1487 = vadd.f32 %v1486, 1.0
  %v1488 = vrcp.pop %v1487
  %v1489 = vmul.f32 1.0, %v1488
  %v1490 = vtanh.pop %v1483
  %v1491 = vmul.f32 %v1489, %v1393
  %1493 = vrot.lane.b32.xlu0 %v1490, 64
  %v1494 = vpop.permute.xlu0 %1493
  %v1496 = vmul.f32 %v1489, %v1494
  %1498 = vrot.lane.b32.xlu0 %v1496, 32
  %v1499 = vpop.permute.xlu0 %1498
  %v1501 = vadd.f32 %v1491, %v1499
  %v1502 = vtanh.pop %v1501
  %1504 = vrot.lane.b32.xlu0 %v1502, 64
  %v1505 = vpop.permute.xlu0 %1504
  %v1507 = vmul.f32 %v1489, %v1505
  %vm1508 = vcmp.eq.s32.totalorder %v32, 3
  %v1509 = vsel %vm1508, 1, 0
  %1510 = vset.pattern.permute.xlu0 0
  %1511 = vperm.xlu0 %1510, %v1509
  %v1512 = vpop.permute.xlu0 %1511
  %vm1513 = vcmp.eq.s32.totalorder %v1512, 1
  %v1514 = vsel %vm1513, %v1507, %v1406
  %v1515 = vld [vmem:[%s508] sm:$0xff]
  %1517 = vrot.lane.b32.xlu0 %v1507, 32
  %v1518 = vpop.permute.xlu0 %1517
  %v1519 = vsel %vm52, %v1518, 0
  %1521 = vmatprep.subr.mxu0 0.0
  %1522 = vmatpush1.msra.mxu0 %v1192
  %1523 = vmatprep.subr.mxu0 0.0
  %1524 = vmatpush1.msra.mxu0 %v1193
  %1525 = vmatprep.subr.mxu0 0.0
  %1526 = vmatpush1.msra.mxu0 %v1194
  %1527 = vmatprep.subr.mxu0 0.0
  %1528 = vmatpush1.msra.mxu0 %v1195
  %1529 = vmatprep.subr.mxu0 0.0
  %1530 = vmatpush1.msra.mxu0 0.0
  %1531 = vmatprep.subr.mxu0 0.0
  %1532 = vmatpush1.msra.mxu0 0.0
  %1533 = vmatprep.subr.mxu0 0.0
  %1534 = vmatpush1.msra.mxu0 0.0
  %1535 = vmatprep.subr.mxu0 0.0
  %1536 = vmatpush1.msra.mxu0 0.0
  %1537 = vmatprep.subr.mxu0 0.0
  %1538 = vmatpush1.msra.mxu0 0.0
  %1539 = vmatprep.subr.mxu0 0.0
  %1540 = vmatpush1.msra.mxu0 0.0
  %1541 = vmatprep.subr.mxu0 0.0
  %1542 = vmatpush1.msra.mxu0 0.0
  %1543 = vmatprep.subr.mxu0 0.0
  %1544 = vmatpush1.msra.mxu0 0.0
  %1545 = vmatprep.subr.mxu0 0.0
  %1546 = vmatpush1.msra.mxu0 0.0
  %1547 = vmatprep.subr.mxu0 0.0
  %1548 = vmatpush1.msra.mxu0 0.0
  %1549 = vmatprep.subr.mxu0 0.0
  %1550 = vmatpush1.msra.mxu0 0.0
  %1551 = vmatprep.subr.mxu0 0.0
  %1552 = vmatpush1.msra.mxu0 0.0
  %1553 = vmatprep.subr.mxu0 0.0
  %1554 = vmatpush1.msra.mxu0 0.0
  %1555 = vmatprep.subr.mxu0 0.0
  %1556 = vmatpush1.msra.mxu0 0.0
  %1557 = vmatprep.subr.mxu0 0.0
  %1558 = vmatpush1.msra.mxu0 0.0
  %1559 = vmatprep.subr.mxu0 0.0
  %1560 = vmatpush1.msra.mxu0 0.0
  %1561 = vmatprep.subr.mxu0 0.0
  %1562 = vmatpush1.msra.mxu0 0.0
  %1563 = vmatprep.subr.mxu0 0.0
  %1564 = vmatpush1.msra.mxu0 0.0
  %1565 = vmatprep.subr.mxu0 0.0
  %1566 = vmatpush1.msra.mxu0 0.0
  %1567 = vmatprep.subr.mxu0 0.0
  %1568 = vmatpush1.msra.mxu0 0.0
  %1569 = vmatprep.subr.mxu0 0.0
  %1570 = vmatpush1.msra.mxu0 0.0
  %1571 = vmatprep.subr.mxu0 0.0
  %1572 = vmatpush1.msra.mxu0 0.0
  %1573 = vmatprep.subr.mxu0 0.0
  %1574 = vmatpush1.msra.mxu0 0.0
  %1575 = vmatprep.subr.mxu0 0.0
  %1576 = vmatpush1.msra.mxu0 0.0
  %1577 = vmatprep.subr.mxu0 0.0
  %1578 = vmatpush1.msra.mxu0 0.0
  %1579 = vmatprep.subr.mxu0 0.0
  %1580 = vmatpush1.msra.mxu0 0.0
  %1581 = vmatprep.subr.mxu0 0.0
  %1582 = vmatpush1.msra.mxu0 0.0
  %1583 = vmatprep.subr.mxu0 0.0
  %1584 = vmatpush1.msra.mxu0 0.0
  %1585 = vmatprep.mubr.f32.mxu0 0.0
  %1586 = vmatmul.mubr.f32.gmra.mrb[0].mxu0 %v1519
  %v1587 = vpop.f32.mrb[0].mxu0
  %v1588 = vadd.f32 0.0, %v1587
  %v1589 = vpop.f32.mrb[0].mxu0
  %1590 = vdwg.mxu0
  %v1591 = vadd.f32 %v1515, %v1588
  %v1592 = vxor.u32 %v1591, 2147483648
  %v1593 = vmul.f32 %v1592, 1.442695
  %v1594 = vpow.pop %v1593
  %v1595 = vadd.f32 %v1594, 1.0
  %v1596 = vrcp.pop %v1595
  %v1597 = vmul.f32 1.0, %v1596
  %v1598 = vtanh.pop %v1591
  %v1599 = vmul.f32 %v1597, %v1501
  %1601 = vrot.lane.b32.xlu0 %v1598, 64
  %v1602 = vpop.permute.xlu0 %1601
  %v1604 = vmul.f32 %v1597, %v1602
  %1606 = vrot.lane.b32.xlu0 %v1604, 32
  %v1607 = vpop.permute.xlu0 %1606
  %v1609 = vadd.f32 %v1599, %v1607
  %v1610 = vtanh.pop %v1609
  %1612 = vrot.lane.b32.xlu0 %v1610, 64
  %v1613 = vpop.permute.xlu0 %1612
  %v1615 = vmul.f32 %v1597, %v1613
  %vm1616 = vcmp.eq.s32.totalorder %v32, 4
  %v1617 = vsel %vm1616, 1, 0
  %1618 = vset.pattern.permute.xlu0 0
  %1619 = vperm.xlu0 %1618, %v1617
  %v1620 = vpop.permute.xlu0 %1619
  %vm1621 = vcmp.eq.s32.totalorder %v1620, 1
  %v1622 = vsel %vm1621, %v1615, %v1514
  %v1623 = vld [vmem:[%s613] sm:$0xff]
  %1625 = vrot.lane.b32.xlu0 %v1615, 32
  %v1626 = vpop.permute.xlu0 %1625
  %v1627 = vsel %vm52, %v1626, 0
  %1629 = vmatprep.subr.mxu0 0.0
  %1630 = vmatpush1.msra.mxu0 %v1192
  %1631 = vmatprep.subr.mxu0 0.0
  %1632 = vmatpush1.msra.mxu0 %v1193
  %1633 = vmatprep.subr.mxu0 0.0
  %1634 = vmatpush1.msra.mxu0 %v1194
  %1635 = vmatprep.subr.mxu0 0.0
  %1636 = vmatpush1.msra.mxu0 %v1195
  %1637 = vmatprep.subr.mxu0 0.0
  %1638 = vmatpush1.msra.mxu0 0.0
  %1639 = vmatprep.subr.mxu0 0.0
  %1640 = vmatpush1.msra.mxu0 0.0
  %1641 = vmatprep.subr.mxu0 0.0
  %1642 = vmatpush1.msra.mxu0 0.0
  %1643 = vmatprep.subr.mxu0 0.0
  %1644 = vmatpush1.msra.mxu0 0.0
  %1645 = vmatprep.subr.mxu0 0.0
  %1646 = vmatpush1.msra.mxu0 0.0
  %1647 = vmatprep.subr.mxu0 0.0
  %1648 = vmatpush1.msra.mxu0 0.0
  %1649 = vmatprep.subr.mxu0 0.0
  %1650 = vmatpush1.msra.mxu0 0.0
  %1651 = vmatprep.subr.mxu0 0.0
  %1652 = vmatpush1.msra.mxu0 0.0
  %1653 = vmatprep.subr.mxu0 0.0
  %1654 = vmatpush1.msra.mxu0 0.0
  %1655 = vmatprep.subr.mxu0 0.0
  %1656 = vmatpush1.msra.mxu0 0.0
  %1657 = vmatprep.subr.mxu0 0.0
  %1658 = vmatpush1.msra.mxu0 0.0
  %1659 = vmatprep.subr.mxu0 0.0
  %1660 = vmatpush1.msra.mxu0 0.0
  %1661 = vmatprep.subr.mxu0 0.0
  %1662 = vmatpush1.msra.mxu0 0.0
  %1663 = vmatprep.subr.mxu0 0.0
  %1664 = vmatpush1.msra.mxu0 0.0
  %1665 = vmatprep.subr.mxu0 0.0
  %1666 = vmatpush1.msra.mxu0 0.0
  %1667 = vmatprep.subr.mxu0 0.0
  %1668 = vmatpush1.msra.mxu0 0.0
  %1669 = vmatprep.subr.mxu0 0.0
  %1670 = vmatpush1.msra.mxu0 0.0
  %1671 = vmatprep.subr.mxu0 0.0
  %1672 = vmatpush1.msra.mxu0 0.0
  %1673 = vmatprep.subr.mxu0 0.0
  %1674 = vmatpush1.msra.mxu0 0.0
  %1675 = vmatprep.subr.mxu0 0.0
  %1676 = vmatpush1.msra.mxu0 0.0
  %1677 = vmatprep.subr.mxu0 0.0
  %1678 = vmatpush1.msra.mxu0 0.0
  %1679 = vmatprep.subr.mxu0 0.0
  %1680 = vmatpush1.msra.mxu0 0.0
  %1681 = vmatprep.subr.mxu0 0.0
  %1682 = vmatpush1.msra.mxu0 0.0
  %1683 = vmatprep.subr.mxu0 0.0
  %1684 = vmatpush1.msra.mxu0 0.0
  %1685 = vmatprep.subr.mxu0 0.0
  %1686 = vmatpush1.msra.mxu0 0.0
  %1687 = vmatprep.subr.mxu0 0.0
  %1688 = vmatpush1.msra.mxu0 0.0
  %1689 = vmatprep.subr.mxu0 0.0
  %1690 = vmatpush1.msra.mxu0 0.0
  %1691 = vmatprep.subr.mxu0 0.0
  %1692 = vmatpush1.msra.mxu0 0.0
  %1693 = vmatprep.mubr.f32.mxu0 0.0
  %1694 = vmatmul.mubr.f32.gmra.mrb[0].mxu0 %v1627
  %v1695 = vpop.f32.mrb[0].mxu0
  %v1696 = vadd.f32 0.0, %v1695
  %v1697 = vpop.f32.mrb[0].mxu0
  %1698 = vdwg.mxu0
  %v1699 = vadd.f32 %v1623, %v1696
  %v1700 = vxor.u32 %v1699, 2147483648
  %v1701 = vmul.f32 %v1700, 1.442695
  %v1702 = vpow.pop %v1701
  %v1703 = vadd.f32 %v1702, 1.0
  %v1704 = vrcp.pop %v1703
  %v1705 = vmul.f32 1.0, %v1704
  %v1706 = vtanh.pop %v1699
  %v1707 = vmul.f32 %v1705, %v1609
  %1709 = vrot.lane.b32.xlu0 %v1706, 64
  %v1710 = vpop.permute.xlu0 %1709
  %v1712 = vmul.f32 %v1705, %v1710
  %1714 = vrot.lane.b32.xlu0 %v1712, 32
  %v1715 = vpop.permute.xlu0 %1714
  %v1717 = vadd.f32 %v1707, %v1715
  %v1718 = vtanh.pop %v1717
  %1720 = vrot.lane.b32.xlu0 %v1718, 64
  %v1721 = vpop.permute.xlu0 %1720
  %v1723 = vmul.f32 %v1705, %v1721
  %vm1724 = vcmp.eq.s32.totalorder %v32, 5
  %v1725 = vsel %vm1724, 1, 0
  %1726 = vset.pattern.permute.xlu0 0
  %1727 = vperm.xlu0 %1726, %v1725
  %v1728 = vpop.permute.xlu0 %1727
  %vm1729 = vcmp.eq.s32.totalorder %v1728, 1
  %v1730 = vsel %vm1729, %v1723, %v1622
  %v1731 = vld [vmem:[%s718] sm:$0xff]
  %1733 = vrot.lane.b32.xlu0 %v1723, 32
  %v1734 = vpop.permute.xlu0 %1733
  %v1735 = vsel %vm52, %v1734, 0
  %1737 = vmatprep.subr.mxu0 0.0
  %1738 = vmatpush1.msra.mxu0 %v1192
  %1739 = vmatprep.subr.mxu0 0.0
  %1740 = vmatpush1.msra.mxu0 %v1193
  %1741 = vmatprep.subr.mxu0 0.0
  %1742 = vmatpush1.msra.mxu0 %v1194
  %1743 = vmatprep.subr.mxu0 0.0
  %1744 = vmatpush1.msra.mxu0 %v1195
  %1745 = vmatprep.subr.mxu0 0.0
  %1746 = vmatpush1.msra.mxu0 0.0
  %1747 = vmatprep.subr.mxu0 0.0
  %1748 = vmatpush1.msra.mxu0 0.0
  %1749 = vmatprep.subr.mxu0 0.0
  %1750 = vmatpush1.msra.mxu0 0.0
  %1751 = vmatprep.subr.mxu0 0.0
  %1752 = vmatpush1.msra.mxu0 0.0
  %1753 = vmatprep.subr.mxu0 0.0
  %1754 = vmatpush1.msra.mxu0 0.0
  %1755 = vmatprep.subr.mxu0 0.0
  %1756 = vmatpush1.msra.mxu0 0.0
  %1757 = vmatprep.subr.mxu0 0.0
  %1758 = vmatpush1.msra.mxu0 0.0
  %1759 = vmatprep.subr.mxu0 0.0
  %1760 = vmatpush1.msra.mxu0 0.0
  %1761 = vmatprep.subr.mxu0 0.0
  %1762 = vmatpush1.msra.mxu0 0.0
  %1763 = vmatprep.subr.mxu0 0.0
  %1764 = vmatpush1.msra.mxu0 0.0
  %1765 = vmatprep.subr.mxu0 0.0
  %1766 = vmatpush1.msra.mxu0 0.0
  %1767 = vmatprep.subr.mxu0 0.0
  %1768 = vmatpush1.msra.mxu0 0.0
  %1769 = vmatprep.subr.mxu0 0.0
  %1770 = vmatpush1.msra.mxu0 0.0
  %1771 = vmatprep.subr.mxu0 0.0
  %1772 = vmatpush1.msra.mxu0 0.0
  %1773 = vmatprep.subr.mxu0 0.0
  %1774 = vmatpush1.msra.mxu0 0.0
  %1775 = vmatprep.subr.mxu0 0.0
  %1776 = vmatpush1.msra.mxu0 0.0
  %1777 = vmatprep.subr.mxu0 0.0
  %1778 = vmatpush1.msra.mxu0 0.0
  %1779 = vmatprep.subr.mxu0 0.0
  %1780 = vmatpush1.msra.mxu0 0.0
  %1781 = vmatprep.subr.mxu0 0.0
  %1782 = vmatpush1.msra.mxu0 0.0
  %1783 = vmatprep.subr.mxu0 0.0
  %1784 = vmatpush1.msra.mxu0 0.0
  %1785 = vmatprep.subr.mxu0 0.0
  %1786 = vmatpush1.msra.mxu0 0.0
  %1787 = vmatprep.subr.mxu0 0.0
  %1788 = vmatpush1.msra.mxu0 0.0
  %1789 = vmatprep.subr.mxu0 0.0
  %1790 = vmatpush1.msra.mxu0 0.0
  %1791 = vmatprep.subr.mxu0 0.0
  %1792 = vmatpush1.msra.mxu0 0.0
  %1793 = vmatprep.subr.mxu0 0.0
  %1794 = vmatpush1.msra.mxu0 0.0
  %1795 = vmatprep.subr.mxu0 0.0
  %1796 = vmatpush1.msra.mxu0 0.0
  %1797 = vmatprep.subr.mxu0 0.0
  %1798 = vmatpush1.msra.mxu0 0.0
  %1799 = vmatprep.subr.mxu0 0.0
  %1800 = vmatpush1.msra.mxu0 0.0
  %1801 = vmatprep.mubr.f32.mxu0 0.0
  %1802 = vmatmul.mubr.f32.gmra.mrb[0].mxu0 %v1735
  %v1803 = vpop.f32.mrb[0].mxu0
  %v1804 = vadd.f32 0.0, %v1803
  %v1805 = vpop.f32.mrb[0].mxu0
  %1806 = vdwg.mxu0
  %v1807 = vadd.f32 %v1731, %v1804
  %v1808 = vxor.u32 %v1807, 2147483648
  %v1809 = vmul.f32 %v1808, 1.442695
  %v1810 = vpow.pop %v1809
  %v1811 = vadd.f32 %v1810, 1.0
  %v1812 = vrcp.pop %v1811
  %v1813 = vmul.f32 1.0, %v1812
  %v1814 = vtanh.pop %v1807
  %v1815 = vmul.f32 %v1813, %v1717
  %1817 = vrot.lane.b32.xlu0 %v1814, 64
  %v1818 = vpop.permute.xlu0 %1817
  %v1820 = vmul.f32 %v1813, %v1818
  %1822 = vrot.lane.b32.xlu0 %v1820, 32
  %v1823 = vpop.permute.xlu0 %1822
  %v1825 = vadd.f32 %v1815, %v1823
  %v1826 = vtanh.pop %v1825
  %1828 = vrot.lane.b32.xlu0 %v1826, 64
  %v1829 = vpop.permute.xlu0 %1828
  %v1831 = vmul.f32 %v1813, %v1829
  %vm1832 = vcmp.eq.s32.totalorder %v32, 6
  %v1833 = vsel %vm1832, 1, 0
  %1834 = vset.pattern.permute.xlu0 0
  %1835 = vperm.xlu0 %1834, %v1833
  %v1836 = vpop.permute.xlu0 %1835
  %vm1837 = vcmp.eq.s32.totalorder %v1836, 1
  %v1838 = vsel %vm1837, %v1831, %v1730
  %v1839 = vld [vmem:[%s823] sm:$0xff]
  %1841 = vrot.lane.b32.xlu0 %v1831, 32
  %v1842 = vpop.permute.xlu0 %1841
  %v1843 = vsel %vm52, %v1842, 0
  %1845 = vmatprep.subr.mxu0 0.0
  %1846 = vmatpush1.msra.mxu0 %v1192
  %1847 = vmatprep.subr.mxu0 0.0
  %1848 = vmatpush1.msra.mxu0 %v1193
  %1849 = vmatprep.subr.mxu0 0.0
  %1850 = vmatpush1.msra.mxu0 %v1194
  %1851 = vmatprep.subr.mxu0 0.0
  %1852 = vmatpush1.msra.mxu0 %v1195
  %1853 = vmatprep.subr.mxu0 0.0
  %1854 = vmatpush1.msra.mxu0 0.0
  %1855 = vmatprep.subr.mxu0 0.0
  %1856 = vmatpush1.msra.mxu0 0.0
  %1857 = vmatprep.subr.mxu0 0.0
  %1858 = vmatpush1.msra.mxu0 0.0
  %1859 = vmatprep.subr.mxu0 0.0
  %1860 = vmatpush1.msra.mxu0 0.0
  %1861 = vmatprep.subr.mxu0 0.0
  %1862 = vmatpush1.msra.mxu0 0.0
  %1863 = vmatprep.subr.mxu0 0.0
  %1864 = vmatpush1.msra.mxu0 0.0
  %1865 = vmatprep.subr.mxu0 0.0
  %1866 = vmatpush1.msra.mxu0 0.0
  %1867 = vmatprep.subr.mxu0 0.0
  %1868 = vmatpush1.msra.mxu0 0.0
  %1869 = vmatprep.subr.mxu0 0.0
  %1870 = vmatpush1.msra.mxu0 0.0
  %1871 = vmatprep.subr.mxu0 0.0
  %1872 = vmatpush1.msra.mxu0 0.0
  %1873 = vmatprep.subr.mxu0 0.0
  %1874 = vmatpush1.msra.mxu0 0.0
  %1875 = vmatprep.subr.mxu0 0.0
  %1876 = vmatpush1.msra.mxu0 0.0
  %1877 = vmatprep.subr.mxu0 0.0
  %1878 = vmatpush1.msra.mxu0 0.0
  %1879 = vmatprep.subr.mxu0 0.0
  %1880 = vmatpush1.msra.mxu0 0.0
  %1881 = vmatprep.subr.mxu0 0.0
  %1882 = vmatpush1.msra.mxu0 0.0
  %1883 = vmatprep.subr.mxu0 0.0
  %1884 = vmatpush1.msra.mxu0 0.0
  %1885 = vmatprep.subr.mxu0 0.0
  %1886 = vmatpush1.msra.mxu0 0.0
  %1887 = vmatprep.subr.mxu0 0.0
  %1888 = vmatpush1.msra.mxu0 0.0
  %1889 = vmatprep.subr.mxu0 0.0
  %1890 = vmatpush1.msra.mxu0 0.0
  %1891 = vmatprep.subr.mxu0 0.0
  %1892 = vmatpush1.msra.mxu0 0.0
  %1893 = vmatprep.subr.mxu0 0.0
  %1894 = vmatpush1.msra.mxu0 0.0
  %1895 = vmatprep.subr.mxu0 0.0
  %1896 = vmatpush1.msra.mxu0 0.0
  %1897 = vmatprep.subr.mxu0 0.0
  %1898 = vmatpush1.msra.mxu0 0.0
  %1899 = vmatprep.subr.mxu0 0.0
  %1900 = vmatpush1.msra.mxu0 0.0
  %1901 = vmatprep.subr.mxu0 0.0
  %1902 = vmatpush1.msra.mxu0 0.0
  %1903 = vmatprep.subr.mxu0 0.0
  %1904 = vmatpush1.msra.mxu0 0.0
  %1905 = vmatprep.subr.mxu0 0.0
  %1906 = vmatpush1.msra.mxu0 0.0
  %1907 = vmatprep.subr.mxu0 0.0
  %1908 = vmatpush1.msra.mxu0 0.0
  %1909 = vmatprep.mubr.f32.mxu0 0.0
  %1910 = vmatmul.mubr.f32.gmra.mrb[0].mxu0 %v1843
  %v1911 = vpop.f32.mrb[0].mxu0
  %v1912 = vadd.f32 0.0, %v1911
  %v1913 = vpop.f32.mrb[0].mxu0
  %1914 = vdwg.mxu0
  %v1915 = vadd.f32 %v1839, %v1912
  %v1916 = vxor.u32 %v1915, 2147483648
  %v1917 = vmul.f32 %v1916, 1.442695
  %v1918 = vpow.pop %v1917
  %v1919 = vadd.f32 %v1918, 1.0
  %v1920 = vrcp.pop %v1919
  %v1921 = vmul.f32 1.0, %v1920
  %v1922 = vtanh.pop %v1915
  %v1923 = vmul.f32 %v1921, %v1825
  %1925 = vrot.lane.b32.xlu0 %v1922, 64
  %v1926 = vpop.permute.xlu0 %1925
  %v1928 = vmul.f32 %v1921, %v1926
  %1930 = vrot.lane.b32.xlu0 %v1928, 32
  %v1931 = vpop.permute.xlu0 %1930
  %v1933 = vadd.f32 %v1923, %v1931
  %v1934 = vtanh.pop %v1933
  %1936 = vrot.lane.b32.xlu0 %v1934, 64
  %v1937 = vpop.permute.xlu0 %1936
  %v1939 = vmul.f32 %v1921, %v1937
  %vm1940 = vcmp.eq.s32.totalorder %v32, 7
  %v1941 = vsel %vm1940, 1, 0
  %1942 = vset.pattern.permute.xlu0 0
  %1943 = vperm.xlu0 %1942, %v1941
  %v1944 = vpop.permute.xlu0 %1943
  %vm1945 = vcmp.eq.s32.totalorder %v1944, 1
  %v1946 = vsel %vm1945, %v1939, %v1838
  %v1947 = vld [vmem:[%s928] sm:$0xff]
  %1949 = vrot.lane.b32.xlu0 %v1939, 32
  %v1950 = vpop.permute.xlu0 %1949
  %v1951 = vsel %vm52, %v1950, 0
  %1953 = vmatprep.subr.mxu0 0.0
  %1954 = vmatpush1.msra.mxu0 %v1192
  %1955 = vmatprep.subr.mxu0 0.0
  %1956 = vmatpush1.msra.mxu0 %v1193
  %1957 = vmatprep.subr.mxu0 0.0
  %1958 = vmatpush1.msra.mxu0 %v1194
  %1959 = vmatprep.subr.mxu0 0.0
  %1960 = vmatpush1.msra.mxu0 %v1195
  %1961 = vmatprep.subr.mxu0 0.0
  %1962 = vmatpush1.msra.mxu0 0.0
  %1963 = vmatprep.subr.mxu0 0.0
  %1964 = vmatpush1.msra.mxu0 0.0
  %1965 = vmatprep.subr.mxu0 0.0
  %1966 = vmatpush1.msra.mxu0 0.0
  %1967 = vmatprep.subr.mxu0 0.0
  %1968 = vmatpush1.msra.mxu0 0.0
  %1969 = vmatprep.subr.mxu0 0.0
  %1970 = vmatpush1.msra.mxu0 0.0
  %1971 = vmatprep.subr.mxu0 0.0
  %1972 = vmatpush1.msra.mxu0 0.0
  %1973 = vmatprep.subr.mxu0 0.0
  %1974 = vmatpush1.msra.mxu0 0.0
  %1975 = vmatprep.subr.mxu0 0.0
  %1976 = vmatpush1.msra.mxu0 0.0
  %1977 = vmatprep.subr.mxu0 0.0
  %1978 = vmatpush1.msra.mxu0 0.0
  %1979 = vmatprep.subr.mxu0 0.0
  %1980 = vmatpush1.msra.mxu0 0.0
  %1981 = vmatprep.subr.mxu0 0.0
  %1982 = vmatpush1.msra.mxu0 0.0
  %1983 = vmatprep.subr.mxu0 0.0
  %1984 = vmatpush1.msra.mxu0 0.0
  %1985 = vmatprep.subr.mxu0 0.0
  %1986 = vmatpush1.msra.mxu0 0.0
  %1987 = vmatprep.subr.mxu0 0.0
  %1988 = vmatpush1.msra.mxu0 0.0
  %1989 = vmatprep.subr.mxu0 0.0
  %1990 = vmatpush1.msra.mxu0 0.0
  %1991 = vmatprep.subr.mxu0 0.0
  %1992 = vmatpush1.msra.mxu0 0.0
  %1993 = vmatprep.subr.mxu0 0.0
  %1994 = vmatpush1.msra.mxu0 0.0
  %1995 = vmatprep.subr.mxu0 0.0
  %1996 = vmatpush1.msra.mxu0 0.0
  %1997 = vmatprep.subr.mxu0 0.0
  %1998 = vmatpush1.msra.mxu0 0.0
  %1999 = vmatprep.subr.mxu0 0.0
  %2000 = vmatpush1.msra.mxu0 0.0
  %2001 = vmatprep.subr.mxu0 0.0
  %2002 = vmatpush1.msra.mxu0 0.0
  %2003 = vmatprep.subr.mxu0 0.0
  %2004 = vmatpush1.msra.mxu0 0.0
  %2005 = vmatprep.subr.mxu0 0.0
  %2006 = vmatpush1.msra.mxu0 0.0
  %2007 = vmatprep.subr.mxu0 0.0
  %2008 = vmatpush1.msra.mxu0 0.0
  %2009 = vmatprep.subr.mxu0 0.0
  %2010 = vmatpush1.msra.mxu0 0.0
  %2011 = vmatprep.subr.mxu0 0.0
  %2012 = vmatpush1.msra.mxu0 0.0
  %2013 = vmatprep.subr.mxu0 0.0
  %2014 = vmatpush1.msra.mxu0 0.0
  %2015 = vmatprep.subr.mxu0 0.0
  %2016 = vmatpush1.msra.mxu0 0.0
  %2017 = vmatprep.mubr.f32.mxu0 0.0
  %2018 = vmatmul.mubr.f32.gmra.mrb[0].mxu0 %v1951
  %v2019 = vpop.f32.mrb[0].mxu0
  %v2020 = vadd.f32 0.0, %v2019
  %v2021 = vpop.f32.mrb[0].mxu0
  %2022 = vdwg.mxu0
  %v2023 = vadd.f32 %v1947, %v2020
  %v2024 = vxor.u32 %v2023, 2147483648
  %v2025 = vmul.f32 %v2024, 1.442695
  %v2026 = vpow.pop %v2025
  %v2027 = vadd.f32 %v2026, 1.0
  %v2028 = vrcp.pop %v2027
  %v2029 = vmul.f32 1.0, %v2028
  %v2030 = vtanh.pop %v2023
  %v2031 = vmul.f32 %v2029, %v1933
  %2033 = vrot.lane.b32.xlu0 %v2030, 64
  %v2034 = vpop.permute.xlu0 %2033
  %v2036 = vmul.f32 %v2029, %v2034
  %2038 = vrot.lane.b32.xlu0 %v2036, 32
  %v2039 = vpop.permute.xlu0 %2038
  %v2041 = vadd.f32 %v2031, %v2039
  %v2042 = vtanh.pop %v2041
  %2044 = vrot.lane.b32.xlu0 %v2042, 64
  %v2045 = vpop.permute.xlu0 %2044
  %v2047 = vmul.f32 %v2029, %v2045
  %vm2048 = vcmp.eq.s32.totalorder %v32, 8
  %v2049 = vsel %vm2048, 1, 0
  %2050 = vset.pattern.permute.xlu0 0
  %2051 = vperm.xlu0 %2050, %v2049
  %v2052 = vpop.permute.xlu0 %2051
  %vm2053 = vcmp.eq.s32.totalorder %v2052, 1
  %v2054 = vsel %vm2053, %v2047, %v1946
  %v2055 = vld [vmem:[%s6] sm:$0xff]
  %v2056 = vld [vmem:[%s6 + $0x8] sm:$0xff]
  %v2057 = vld [vmem:[%s6 + $0x10] sm:$0xff]
  %v2058 = vld [vmem:[%s6 + $0x18] sm:$0xff]
  %v2059 = vld [vmem:[%s5] sm:$0xff]
  %v2060 = vld [vmem:[%s7] sm:$0xff]
  %v2061 = vld [vmem:[%s7 + $0x8] sm:$0xff]
  %v2062 = vld [vmem:[%s7 + $0x10] sm:$0xff]
  %v2063 = vld [vmem:[%s7 + $0x18] sm:$0xff]
  %v2064 = vld [vmem:[%s7 + $0x20] sm:$0xff]
  %v2065 = vld [vmem:[%s7 + $0x28] sm:$0xff]
  %v2066 = vld [vmem:[%s7 + $0x30] sm:$0xff]
  %v2067 = vld [vmem:[%s7 + $0x38] sm:$0xff]
  %v2068 = vld [vmem:[%s7 + $0x40] sm:$0xff]
  %v2069 = vld [vmem:[%s7 + $0x48] sm:$0xff]
  %v2070 = vld [vmem:[%s7 + $0x50] sm:$0xff]
  %v2071 = vld [vmem:[%s7 + $0x58] sm:$0xff]
  %v2072 = vld [vmem:[%s7 + $0x60] sm:$0xf]
  %vm2073 = vcmask 818176
  %v2075 = vsel %vm2073, %v2059, 0
  %vm2077 = vcmask 1043456
  %v2079 = vsel %vm2077, %v2072, 0
  %2081 = vmatprep.subr.mxu0 0.0
  %2082 = vmatpush1.msra.mxu0 %v2060
  %2083 = vmatprep.subr.mxu0 0.0
  %2084 = vmatpush1.msra.mxu0 %v2061
  %2085 = vmatprep.subr.mxu0 0.0
  %2086 = vmatpush1.msra.mxu0 %v2062
  %2087 = vmatprep.subr.mxu0 0.0
  %2088 = vmatpush1.msra.mxu0 %v2063
  %2089 = vmatprep.subr.mxu0 0.0
  %2090 = vmatpush1.msra.mxu0 %v2064
  %2091 = vmatprep.subr.mxu0 0.0
  %2092 = vmatpush1.msra.mxu0 %v2065
  %2093 = vmatprep.subr.mxu0 0.0
  %2094 = vmatpush1.msra.mxu0 %v2066
  %2095 = vmatprep.subr.mxu0 0.0
  %2096 = vmatpush1.msra.mxu0 %v2067
  %2097 = vmatprep.subr.mxu0 0.0
  %2098 = vmatpush1.msra.mxu0 %v2068
  %2099 = vmatprep.subr.mxu0 0.0
  %2100 = vmatpush1.msra.mxu0 %v2069
  %2101 = vmatprep.subr.mxu0 0.0
  %2102 = vmatpush1.msra.mxu0 %v2070
  %2103 = vmatprep.subr.mxu0 0.0
  %2104 = vmatpush1.msra.mxu0 %v2071
  %2105 = vmatprep.subr.mxu0 0.0
  %2106 = vmatpush1.msra.mxu0 %v2079
  %2107 = vmatprep.subr.mxu0 0.0
  %2108 = vmatpush1.msra.mxu0 0.0
  %2109 = vmatprep.subr.mxu0 0.0
  %2110 = vmatpush1.msra.mxu0 0.0
  %2111 = vmatprep.subr.mxu0 0.0
  %2112 = vmatpush1.msra.mxu0 0.0
  %2113 = vmatprep.subr.mxu0 0.0
  %2114 = vmatpush1.msra.mxu0 0.0
  %2115 = vmatprep.subr.mxu0 0.0
  %2116 = vmatpush1.msra.mxu0 0.0
  %2117 = vmatprep.subr.mxu0 0.0
  %2118 = vmatpush1.msra.mxu0 0.0
  %2119 = vmatprep.subr.mxu0 0.0
  %2120 = vmatpush1.msra.mxu0 0.0
  %2121 = vmatprep.subr.mxu0 0.0
  %2122 = vmatpush1.msra.mxu0 0.0
  %2123 = vmatprep.subr.mxu0 0.0
  %2124 = vmatpush1.msra.mxu0 0.0
  %2125 = vmatprep.subr.mxu0 0.0
  %2126 = vmatpush1.msra.mxu0 0.0
  %2127 = vmatprep.subr.mxu0 0.0
  %2128 = vmatpush1.msra.mxu0 0.0
  %2129 = vmatprep.subr.mxu0 0.0
  %2130 = vmatpush1.msra.mxu0 0.0
  %2131 = vmatprep.subr.mxu0 0.0
  %2132 = vmatpush1.msra.mxu0 0.0
  %2133 = vmatprep.subr.mxu0 0.0
  %2134 = vmatpush1.msra.mxu0 0.0
  %2135 = vmatprep.subr.mxu0 0.0
  %2136 = vmatpush1.msra.mxu0 0.0
  %2137 = vmatprep.subr.mxu0 0.0
  %2138 = vmatpush1.msra.mxu0 0.0
  %2139 = vmatprep.subr.mxu0 0.0
  %2140 = vmatpush1.msra.mxu0 0.0
  %2141 = vmatprep.subr.mxu0 0.0
  %2142 = vmatpush1.msra.mxu0 0.0
  %2143 = vmatprep.subr.mxu0 0.0
  %2144 = vmatpush1.msra.mxu0 0.0
  %2145 = vmatprep.mubr.f32.mxu0 0.0
  %2146 = vmatmul.mubr.f32.gmra.mrb[0].mxu0 %v2075
  %v2147 = vpop.f32.mrb[0].mxu0
  %v2148 = vadd.f32 0.0, %v2147
  %v2149 = vpop.f32.mrb[0].mxu0
  %2150 = vdwg.mxu0
  %2152 = vrot.lane.b32.xlu0 %v2054, 32
  %v2153 = vpop.permute.xlu0 %2152
  %v2154 = vsel %vm52, %v2153, 0
  %2156 = vmatprep.subr.mxu0 0.0
  %2157 = vmatpush1.msra.mxu0 %v2055
  %2158 = vmatprep.subr.mxu0 0.0
  %2159 = vmatpush1.msra.mxu0 %v2056
  %2160 = vmatprep.subr.mxu0 0.0
  %2161 = vmatpush1.msra.mxu0 %v2057
  %2162 = vmatprep.subr.mxu0 0.0
  %2163 = vmatpush1.msra.mxu0 %v2058
  %2164 = vmatprep.subr.mxu0 0.0
  %2165 = vmatpush1.msra.mxu0 0.0
  %2166 = vmatprep.subr.mxu0 0.0
  %2167 = vmatpush1.msra.mxu0 0.0
  %2168 = vmatprep.subr.mxu0 0.0
  %2169 = vmatpush1.msra.mxu0 0.0
  %2170 = vmatprep.subr.mxu0 0.0
  %2171 = vmatpush1.msra.mxu0 0.0
  %2172 = vmatprep.subr.mxu0 0.0
  %2173 = vmatpush1.msra.mxu0 0.0
  %2174 = vmatprep.subr.mxu0 0.0
  %2175 = vmatpush1.msra.mxu0 0.0
  %2176 = vmatprep.subr.mxu0 0.0
  %2177 = vmatpush1.msra.mxu0 0.0
  %2178 = vmatprep.subr.mxu0 0.0
  %2179 = vmatpush1.msra.mxu0 0.0
  %2180 = vmatprep.subr.mxu0 0.0
  %2181 = vmatpush1.msra.mxu0 0.0
  %2182 = vmatprep.subr.mxu0 0.0
  %2183 = vmatpush1.msra.mxu0 0.0
  %2184 = vmatprep.subr.mxu0 0.0
  %2185 = vmatpush1.msra.mxu0 0.0
  %2186 = vmatprep.subr.mxu0 0.0
  %2187 = vmatpush1.msra.mxu0 0.0
  %2188 = vmatprep.subr.mxu0 0.0
  %2189 = vmatpush1.msra.mxu0 0.0
  %2190 = vmatprep.subr.mxu0 0.0
  %2191 = vmatpush1.msra.mxu0 0.0
  %2192 = vmatprep.subr.mxu0 0.0
  %2193 = vmatpush1.msra.mxu0 0.0
  %2194 = vmatprep.subr.mxu0 0.0
  %2195 = vmatpush1.msra.mxu0 0.0
  %2196 = vmatprep.subr.mxu0 0.0
  %2197 = vmatpush1.msra.mxu0 0.0
  %2198 = vmatprep.subr.mxu0 0.0
  %2199 = vmatpush1.msra.mxu0 0.0
  %2200 = vmatprep.subr.mxu0 0.0
  %2201 = vmatpush1.msra.mxu0 0.0
  %2202 = vmatprep.subr.mxu0 0.0
  %2203 = vmatpush1.msra.mxu0 0.0
  %2204 = vmatprep.subr.mxu0 0.0
  %2205 = vmatpush1.msra.mxu0 0.0
  %2206 = vmatprep.subr.mxu0 0.0
  %2207 = vmatpush1.msra.mxu0 0.0
  %2208 = vmatprep.subr.mxu0 0.0
  %2209 = vmatpush1.msra.mxu0 0.0
  %2210 = vmatprep.subr.mxu0 0.0
  %2211 = vmatpush1.msra.mxu0 0.0
  %2212 = vmatprep.subr.mxu0 0.0
  %2213 = vmatpush1.msra.mxu0 0.0
  %2214 = vmatprep.subr.mxu0 0.0
  %2215 = vmatpush1.msra.mxu0 0.0
  %2216 = vmatprep.subr.mxu0 0.0
  %2217 = vmatpush1.msra.mxu0 0.0
  %2218 = vmatprep.subr.mxu0 0.0
  %2219 = vmatpush1.msra.mxu0 0.0
  %2220 = vmatprep.mubr.f32.mxu0 0.0
  %2221 = vmatmul.mubr.f32.gmra.mrb[0].mxu0 %v2154
  %v2222 = vpop.f32.mrb[0].mxu0
  %v2223 = vadd.f32 %v2148, %v2222
  %v2224 = vpop.f32.mrb[0].mxu0
  %2225 = vdwg.mxu0
  %v2226 = vld [vmem:[%s8] sm:$0x1]
  %v2228 = vlaneseq
  %v2229 = vshrl.u32 %v2228, 7
  %v2230 = vsub.s32 0, %v2229
  %v2231 = vrot.slane %v2226, %v2230
  %v2233 = vadd.f32 %v2223, %v2231
  %2234 = vst [vmem:[%s9] sm:$0xff] %v2233
  // Predicated region
  $region38: #{sentiment_lstm_forward.1} parent=0 // pred_check
    _
  $region39: #{sentiment_lstm_forward.1} parent=0 // pred_check_branch
    %2236 = sbr.rel (0) target = $region41
  $region40: #{sentiment_lstm_forward.1} parent=0 // pred_region
    _
  $region41: #{sentiment_lstm_forward.1} parent=0 // pred_fallthru
    _
  // Predicated region
  $region42: #{sentiment_lstm_forward.1} parent=0 // pred_check
    _
  $region43: #{sentiment_lstm_forward.1} parent=0 // pred_check_branch
    %2238 = sbr.rel (0) target = $region45
  $region44: #{sentiment_lstm_forward.1} parent=0 // pred_region
    _
  $region45: #{sentiment_lstm_forward.1} parent=0 // pred_fallthru
    _

</llo_original>
